<compile_context>
chip_gen: v5e
topology: v5e:2x2
jax: 0.10.0
libtpu: 0.0.40
codegen_flags: <defaults>
</compile_context>

<pallas_src>
import functools

import jax
import jax.numpy as jnp
import numpy as np
from jax import lax
from jax.experimental import pallas as pl
from jax.experimental.pallas import tpu as pltpu

EPS = 1e-5
LANE = 128
SUB = 8
MCHUNK_MAX = 256                       # rows per register-resident accumulator chunk
RESIDENT_1BUF_BYTES = 2 * 1024 * 1024  # single-buffer grid-invariant operands above this size


def _round_up(x, m):
    return (x + m - 1) // m * m


def _nbytes(shape, dtype):
    return int(np.prod(shape)) * jnp.dtype(dtype).itemsize


def _resident_spec(shape, dtype):
    """BlockSpec for a grid-invariant operand (weights/biases stay resident in VMEM).

    Large operands request single-buffering (pl.Buffered(1)) to halve residency (matters on
    v7x's 64 MiB VMEM for Cout=512 layers); small ones keep the default to avoid any risk.
    """
    index_map = lambda n: (0,) * len(shape)
    if _nbytes(shape, dtype) >= RESIDENT_1BUF_BYTES:
        return pl.BlockSpec(shape, index_map, pipeline_mode=pl.Buffered(1))
    return pl.BlockSpec(shape, index_map)


# --------------------------------------------------------------------------- fused kernel
def _resblock_kernel(xcol_ref, w1_ref, b1_ref, w2_ref, b2_ref, wsc_ref, bsc_ref,
                     o_ref, y1_ref, *, wq2, wo, m, mc, n_chunks, cout_p):
    """Whole residual block for one image.

    xcol_ref: (m_pad, k1) bf16 im2col rows; row p = i*wq2 + j holds the 3x3xCin patch at conv1
              output (i, j) packed tap-major along lanes (cols j >= Wo / rows p >= m are
              don't-cares masked to zero in-kernel).
    w1_ref  : (k1, cout_p) bf16, BN1 scale folded in (im2col-packed rows).
    w2_ref  : (9*cout_p, cout_p) bf16, BN2 scale folded in (tap-major, cout_p rows per tap).
    wsc_ref : (k1, cout_p) bf16 shortcut matrix (1x1-conv/BN folded, or identity) acting on the
              centre-tap columns of the im2col rows.
    b*_ref  : (1, cout_p) f32 folded biases.
    o_ref   : (m_pad, cout_p) f32 flat output, lane-dense store.
    y1_ref  : (l2, cout_p) bf16 VMEM scratch: zero-bordered flat conv2 input.
    """
    k = 3
    halo = wq2 + 1
    l2 = y1_ref.shape[0]
    m_pad = mc * n_chunks

    # ---- zero ONLY the halo rows of the staging scratch (interior is fully overwritten) ----
    y1_ref[0:halo, :] = jnp.zeros((halo, cout_p), y1_ref.dtype)
    tail = halo + m_pad
    y1_ref[tail:l2, :] = jnp.zeros((l2 - tail, cout_p), y1_ref.dtype)

    # ---- pass 1: conv1 (single K-packed matmul per chunk) -> BN1 -> ReLU -> stage (bf16) ----
    for c in range(n_chunks):
        r0 = c * mc
        acc = jnp.dot(xcol_ref[r0:r0 + mc, :], w1_ref[...],
                      preferred_element_type=jnp.float32)
        y = jnp.maximum(acc + b1_ref[...], 0.0)
        # in-kernel wrap-around / padding mask (replaces the old (m,1) HBM mask operand)
        rows = r0 + lax.broadcasted_iota(jnp.int32, (mc, cout_p), 0)
        valid = ((rows % wq2) < wo) & (rows < m)
        y = jnp.where(valid, y, 0.0)
        # staged at logical padded position (i+1, j+1); masked cols land on the zero borders
        y1_ref[halo + r0:halo + r0 + mc, :] = y.astype(y1_ref.dtype)

    # ---- pass 2: conv2 (9 tap dots, chunk acc in regs) + BN2 + shortcut + ReLU --------------
    for c in range(n_chunks):
        r0 = c * mc
        # shortcut dot initialises the register-resident accumulator
        acc = jnp.dot(xcol_ref[r0:r0 + mc, :], wsc_ref[...],
                      preferred_element_type=jnp.float32)
        for dh in range(k):
            for dw in range(k):
                base = r0 + dh * wq2 + dw
                wrow = (dh * k + dw) * cout_p
                acc = acc + jnp.dot(y1_ref[base:base + mc, :],
                                    w2_ref[wrow:wrow + cout_p, :],
                                    preferred_element_type=jnp.float32)
        out = acc + b2_ref[...] + bsc_ref[...]
        o_ref[r0:r0 + mc, :] = jnp.maximum(out, 0.0).astype(o_ref.dtype)


# --------------------------------------------------------------------------- wrapper glue
def _fold_bn(gamma, beta, mean, var):
    scale = gamma / jnp.sqrt(var + EPS)
    return scale, beta - mean * scale


def _w3x3_packed(w_oihw, scale, k1, cout_p):
    """(Cout,Cin,3,3) -> (k1, cout_p) bf16: im2col-packed rows (tap-major, Cin-minor), BN folded."""
    co, ci, kh, kw = w_oihw.shape
    wm = jnp.transpose(w_oihw, (2, 3, 1, 0)) * scale[None, None, None, :]
    wm = wm.reshape(kh * kw * ci, co)
    return jnp.pad(wm, ((0, k1 - kh * kw * ci), (0, cout_p - co))).astype(jnp.bfloat16)


def _w3x3_tapmat(w_oihw, scale, cin_p, cout_p):
    """(Cout,Cin,3,3) -> (9*cin_p, cout_p) bf16: tap-major with channel-padded taps, BN folded."""
    co, ci, kh, kw = w_oihw.shape
    wm = jnp.transpose(w_oihw, (2, 3, 1, 0)) * scale[None, None, None, :]
    wm = jnp.pad(wm, ((0, 0), (0, 0), (0, cin_p - ci), (0, cout_p - co)))
    return wm.reshape(kh * kw * cin_p, cout_p).astype(jnp.bfloat16)


def _pad_bias(v, cout_p):
    return jnp.pad(v, (0, cout_p - v.shape[0])).reshape(1, cout_p).astype(jnp.float32)


def _im2col(x_nhwc, stride, ho, wq2, k1, m_pad):
    """NHWC -> (N, m_pad, k1) bf16 im2col rows for a 3x3/pad-1 conv, wq2 columns per row group."""
    N, H, W, C = x_nhwc.shape
    s = stride
    wpad_hi = max(1, s * (wq2 - 1) + 2 - W)     # right pad so the widest gather stays in-bounds
    xp = jnp.pad(x_nhwc, ((0, 0), (1, 1), (1, wpad_hi), (0, 0))).astype(jnp.bfloat16)
    taps = [xp[:, dh:dh + s * (ho - 1) + 1:s, dw:dw + s * (wq2 - 1) + 1:s, :]
            for dh in range(3) for dw in range(3)]
    xcol = jnp.concatenate(taps, axis=-1).reshape(N, ho * wq2, 9 * C)
    return jnp.pad(xcol, ((0, 0), (0, m_pad - ho * wq2), (0, k1 - 9 * C)))


# --------------------------------------------------------------------------- module
def init_residual_block_params(key, inchannel, outchannel, stride=1):
    ks = jax.random.split(key, 16)
    p = {
        "w1": jax.random.normal(ks[0], (outchannel, inchannel, 3, 3), jnp.float32) * 0.1,
        "bn1_g": 1.0 + 0.1 * jax.random.normal(ks[1], (outchannel,), jnp.float32),
        "bn1_b": 0.1 * jax.random.normal(ks[2], (outchannel,), jnp.float32),
        "bn1_m": 0.1 * jax.random.normal(ks[3], (outchannel,), jnp.float32),
        "bn1_v": 0.5 + jax.random.uniform(ks[4], (outchannel,), jnp.float32),
        "w2": jax.random.normal(ks[5], (outchannel, outchannel, 3, 3), jnp.float32) * 0.1,
        "bn2_g": 1.0 + 0.1 * jax.random.normal(ks[6], (outchannel,), jnp.float32),
        "bn2_b": 0.1 * jax.random.normal(ks[7], (outchannel,), jnp.float32),
        "bn2_m": 0.1 * jax.random.normal(ks[8], (outchannel,), jnp.float32),
        "bn2_v": 0.5 + jax.random.uniform(ks[9], (outchannel,), jnp.float32),
    }
    if stride != 1 or inchannel != outchannel:
        p.update({
            "wsc": jax.random.normal(ks[10], (outchannel, inchannel, 1, 1), jnp.float32) * 0.1,
            "bnsc_g": 1.0 + 0.1 * jax.random.normal(ks[11], (outchannel,), jnp.float32),
            "bnsc_b": 0.1 * jax.random.normal(ks[12], (outchannel,), jnp.float32),
            "bnsc_m": 0.1 * jax.random.normal(ks[13], (outchannel,), jnp.float32),
            "bnsc_v": 0.5 + jax.random.uniform(ks[14], (outchannel,), jnp.float32),
        })
    return p


@functools.partial(jax.jit, static_argnames=("stride",))
def residual_block_forward(params, x_nchw, stride=1):
    """Forward pass matching the PyTorch ResidualBlock (eval-mode BN). NCHW in/out."""
    x = jnp.transpose(x_nchw, (0, 2, 3, 1))              # -> NHWC
    N, H, W, Cin = x.shape
    Cout = params["w1"].shape[0]
    s = stride
    Ho = (H - 1) // s + 1                                 # 3x3 conv, pad 1, stride s
    Wo = (W - 1) // s + 1
    wq2 = Wo + 2                                          # working width incl. wrap-around cols
    m = Ho * wq2
    n_chunks = -(-m // MCHUNK_MAX)
    mc = _round_up(-(-m // n_chunks), SUB)                # rows per register-resident chunk
    m_pad = mc * n_chunks
    k1 = _round_up(9 * Cin, LANE)                         # conv1 K: all 9 taps packed on lanes
    cout_p = _round_up(Cout, LANE)                        # lane-dense output channels
    l2 = _round_up(m_pad + 2 * wq2 + 2, SUB)              # bf16 y1 staging scratch rows

    # Fold BN scales into bf16 weight matrices; kernel epilogues only add the folded biases.
    s1, b1 = _fold_bn(params["bn1_g"], params["bn1_b"], params["bn1_m"], params["bn1_v"])
    s2, b2 = _fold_bn(params["bn2_g"], params["bn2_b"], params["bn2_m"], params["bn2_v"])
    w1m = _w3x3_packed(params["w1"], s1, k1, cout_p)
    w2m = _w3x3_tapmat(params["w2"], s2, cout_p, cout_p)
    b1m = _pad_bias(b1, cout_p)
    b2m = _pad_bias(b2, cout_p)

    # Shortcut as a (k1, cout_p) matmul on the same im2col rows: its input x[n, s*i, s*j, :]
    # is exactly conv1's centre tap (dh=dw=1) -> rows [4*Cin, 5*Cin) of the packed K axis.
    if "wsc" in params:
        ssc, bsc = _fold_bn(params["bnsc_g"], params["bnsc_b"],
                            params["bnsc_m"], params["bnsc_v"])
        wsc_small = params["wsc"][:, :, 0, 0].T * ssc[None, :]
        bscm = _pad_bias(bsc, cout_p)
    else:
        wsc_small = jnp.eye(Cin, dtype=jnp.float32)       # identity shortcut (Cin == Cout)
        bscm = jnp.zeros((1, cout_p), jnp.float32)
    wscm = jnp.zeros((k1, cout_p), jnp.float32)
    wscm = wscm.at[4 * Cin:5 * Cin, :wsc_small.shape[1]].set(wsc_small).astype(jnp.bfloat16)

    xcol = _im2col(x, s, Ho, wq2, k1, m_pad)

    kernel = functools.partial(_resblock_kernel, wq2=wq2, wo=Wo, m=m, mc=mc,
                               n_chunks=n_chunks, cout_p=cout_p)

    # Derive the VMEM budget from the actual footprint instead of hard-coding a limit.
    vmem_need = (2 * _nbytes((m_pad, k1), jnp.bfloat16)          # xcol (double-buffered)
                 + 2 * _nbytes((m_pad, cout_p), jnp.float32)     # out  (double-buffered)
                 + 2 * (2 * _nbytes((k1, cout_p), jnp.bfloat16)  # w1 + shortcut matrix
                        + _nbytes((9 * cout_p, cout_p), jnp.bfloat16)
                        + 3 * _nbytes((1, cout_p), jnp.float32))
                 + _nbytes((l2, cout_p), jnp.bfloat16))          # y1 staging scratch
    vmem_limit = int(min(max(2 * vmem_need, 32 << 20), 64 << 20))

    out = pl.pallas_call(
        kernel,
        out_shape=jax.ShapeDtypeStruct((N, m_pad, cout_p), jnp.float32),
        grid=(N,),
        in_specs=[
            pl.BlockSpec((None, m_pad, k1), lambda n: (n, 0, 0)),   # per-image im2col rows
            _resident_spec((k1, cout_p), jnp.bfloat16),             # w1 (BN1 folded)
            _resident_spec((1, cout_p), jnp.float32),               # b1
            _resident_spec((9 * cout_p, cout_p), jnp.bfloat16),     # w2 (BN2 folded)
            _resident_spec((1, cout_p), jnp.float32),               # b2
            _resident_spec((k1, cout_p), jnp.bfloat16),             # shortcut matrix
            _resident_spec((1, cout_p), jnp.float32),               # shortcut bias
        ],
        out_specs=pl.BlockSpec((None, m_pad, cout_p), lambda n: (n, 0, 0)),
        scratch_shapes=[pltpu.VMEM((l2, cout_p), jnp.bfloat16)],
        compiler_params=pltpu.CompilerParams(
            dimension_semantics=("parallel",),
            vmem_limit_bytes=vmem_limit),
    )(xcol, w1m, b1m, w2m, b2m, wscm, bscm)

    out = out[:, :m, :].reshape(N, Ho, wq2, cout_p)[:, :, :Wo, :Cout]
    return jnp.transpose(out, (0, 3, 1, 2))               # -> NCHW


# --------------------------------------------------------------------------- pure-JAX reference
def _ref_conv(x_nchw, w, stride, pad):
    return jax.lax.conv_general_dilated(
        x_nchw, w, window_strides=(stride, stride),
        padding=((pad, pad), (pad, pad)),
        dimension_numbers=("NCHW", "OIHW", "NCHW"))


def _ref_bn(x_nchw, g, b, m, v):
    g, b, m, v = (t.reshape(1, -1, 1, 1) for t in (g, b, m, v))
    return (x_nchw - m) / jnp.sqrt(v + EPS) * g + b


def residual_block_reference(params, x, stride=1):
    out = _ref_conv(x, params["w1"], stride, 1)
    out = jnp.maximum(_ref_bn(out, params["bn1_g"], params["bn1_b"],
                              params["bn1_m"], params["bn1_v"]), 0.0)
    out = _ref_conv(out, params["w2"], 1, 1)
    out = _ref_bn(out, params["bn2_g"], params["bn2_b"], params["bn2_m"], params["bn2_v"])
    if "wsc" in params:
        sc = _ref_conv(x, params["wsc"], stride, 0)
        sc = _ref_bn(sc, params["bnsc_g"], params["bnsc_b"],
                     params["bnsc_m"], params["bnsc_v"])
    else:
        sc = x
    return jnp.maximum(out + sc, 0.0)


# --------------------------------------------------------------------------- main
if __name__ == "__main__":
    key = jax.random.PRNGKey(0)
    k_x, k_p, k_x2, k_p2 = jax.random.split(key, 4)

    # config A: strided block with 1x1-conv shortcut (downsample case)
    N, Cin, Cout, H, W, stride = 2, 4, 8, 16, 16, 2
    x = jax.random.normal(k_x, (N, Cin, H, W), jnp.float32)
    params = init_residual_block_params(k_p, Cin, Cout, stride)
    out = jax.block_until_ready(residual_block_forward(params, x, stride=stride))
    ref = jax.block_until_ready(residual_block_reference(params, x, stride=stride))
    np.testing.assert_allclose(np.asarray(out), np.asarray(ref), rtol=2e-2, atol=2e-2)

    # config B: identity shortcut (stride=1, inchannel == outchannel)
    x2 = jax.random.normal(k_x2, (2, 8, 16, 16), jnp.float32)
    params2 = init_residual_block_params(k_p2, 8, 8, 1)
    out2 = jax.block_until_ready(residual_block_forward(params2, x2, stride=1))
    ref2 = jax.block_until_ready(residual_block_reference(params2, x2, stride=1))
    np.testing.assert_allclose(np.asarray(out2), np.asarray(ref2), rtol=2e-2, atol=2e-2)

    print("KERNEL_OK")
</pallas_src>

<mosaic_0001>
module attributes {stable_mosaic.version = 11 : i64} {
  func.func @_resblock_kernel(%arg0: i32, %arg1: memref<1x80x128xbf16, #tpu.memory_space<vmem>>, %arg2: memref<128x128xbf16, #tpu.memory_space<vmem>>, %arg3: memref<1x128xf32, #tpu.memory_space<vmem>>, %arg4: memref<1152x128xbf16, #tpu.memory_space<vmem>>, %arg5: memref<1x128xf32, #tpu.memory_space<vmem>>, %arg6: memref<128x128xbf16, #tpu.memory_space<vmem>>, %arg7: memref<1x128xf32, #tpu.memory_space<vmem>>, %arg8: memref<1x80x128xf32, #tpu.memory_space<vmem>>, %arg9: memref<104x128xbf16, #tpu.memory_space<vmem>>) attributes {dimension_semantics = [#tpu.dimension_semantics<parallel>], iteration_bounds = array<i64: 2>, scalar_prefetch = 0 : i64, scratch_operands = 1 : i64, tpu.core_type = #tpu.core_type<tc>, window_params = [{transform_indices = @transform_0, window_bounds = array<i64: 1, 80, 128>}, {pipeline_mode = #tpu.pipeline_mode<synchronous>, transform_indices = @transform_1, window_bounds = array<i64: 128, 128>}, {pipeline_mode = #tpu.pipeline_mode<synchronous>, transform_indices = @transform_2, window_bounds = array<i64: 1, 128>}, {pipeline_mode = #tpu.pipeline_mode<synchronous>, transform_indices = @transform_3, window_bounds = array<i64: 1152, 128>}, {pipeline_mode = #tpu.pipeline_mode<synchronous>, transform_indices = @transform_4, window_bounds = array<i64: 1, 128>}, {pipeline_mode = #tpu.pipeline_mode<synchronous>, transform_indices = @transform_5, window_bounds = array<i64: 128, 128>}, {pipeline_mode = #tpu.pipeline_mode<synchronous>, transform_indices = @transform_6, window_bounds = array<i64: 1, 128>}, {transform_indices = @transform_7, window_bounds = array<i64: 1, 80, 128>}]} {
    %cst = arith.constant 0.000000e+00 : bf16
    %0 = vector.broadcast %cst : bf16 to vector<11x128xbf16>
    %c0 = arith.constant 0 : index
    %c0_0 = arith.constant 0 : index
    %1 = vector.load %arg9[%c0, %c0_0] : memref<104x128xbf16, #tpu.memory_space<vmem>>, vector<11x128xbf16>
    tpu.vector_store %arg9[%c0, %c0_0], %0 {strides = array<i32>} : memref<104x128xbf16, #tpu.memory_space<vmem>>, vector<11x128xbf16>,
    %cst_1 = arith.constant 0.000000e+00 : bf16
    %2 = vector.broadcast %cst_1 : bf16 to vector<13x128xbf16>
    %c91 = arith.constant 91 : index
    %c0_2 = arith.constant 0 : index
    %3 = vector.load %arg9[%c91, %c0_2] : memref<104x128xbf16, #tpu.memory_space<vmem>>, vector<13x128xbf16>
    tpu.vector_store %arg9[%c91, %c0_2], %2 {strides = array<i32>} : memref<104x128xbf16, #tpu.memory_space<vmem>>, vector<13x128xbf16>,
    %c0_3 = arith.constant 0 : index
    %c0_4 = arith.constant 0 : index
    %c0_5 = arith.constant 0 : index
    %4 = vector.load %arg1[%c0_3, %c0_4, %c0_5] : memref<1x80x128xbf16, #tpu.memory_space<vmem>>, vector<1x80x128xbf16>
    %5 = vector.shape_cast %4 : vector<1x80x128xbf16> to vector<80x128xbf16>
    %c0_6 = arith.constant 0 : index
    %c0_7 = arith.constant 0 : index
    %6 = vector.load %arg2[%c0_6, %c0_7] : memref<128x128xbf16, #tpu.memory_space<vmem>>, vector<128x128xbf16>
    %cst_8 = arith.constant dense<0.000000e+00> : vector<80x128xf32>
    %7 = tpu.matmul %5, %6, %cst_8 {dimension_numbers = #tpu.dot_dimension_numbers<[1], [0], [0], [1], [0, 0, 1, 1], [], []>} : vector<80x128xbf16>, vector<128x128xbf16>, vector<80x128xf32> -> vector<80x128xf32>
    %c0_9 = arith.constant 0 : index
    %c0_10 = arith.constant 0 : index
    %8 = vector.load %arg3[%c0_9, %c0_10] : memref<1x128xf32, #tpu.memory_space<vmem>>, vector<1x128xf32>
    %9 = vector.broadcast %8 : vector<1x128xf32> to vector<80x128xf32>
    %10 = arith.addf %7, %9 : vector<80x128xf32>
    %cst_11 = arith.constant 0.000000e+00 : f32
    %11 = vector.broadcast %cst_11 : f32 to vector<80x128xf32>
    %12 = arith.maximumf %10, %11 : vector<80x128xf32>
    %13 = tpu.iota {dimensions = array<i32: 0>} : vector<80x128xi32>
    %c0_i32 = arith.constant 0 : i32
    %14 = vector.broadcast %c0_i32 : i32 to vector<80x128xi32>
    %15 = arith.addi %14, %13 : vector<80x128xi32>
    %c10_i32 = arith.constant 10 : i32
    %c0_i32_12 = arith.constant 0 : i32
    %16 = arith.cmpi eq, %c10_i32, %c0_i32_12 : i32
    %c1_i32 = arith.constant 1 : i32
    %17 = arith.select %16, %c1_i32, %c10_i32 : i32
    %18 = vector.broadcast %17 : i32 to vector<80x128xi32>
    %19 = arith.remsi %15, %18 : vector<80x128xi32>
    %c0_i32_13 = arith.constant 0 : i32
    %20 = vector.broadcast %c0_i32_13 : i32 to vector<80x128xi32>
    %21 = arith.cmpi ne, %19, %20 : vector<80x128xi32>
    %c0_i32_14 = arith.constant 0 : i32
    %22 = vector.broadcast %c0_i32_14 : i32 to vector<80x128xi32>
    %23 = arith.cmpi slt, %19, %22 : vector<80x128xi32>
    %c0_i32_15 = arith.constant 0 : i32
    %24 = arith.cmpi slt, %17, %c0_i32_15 : i32
    %25 = vector.broadcast %24 : i1 to vector<80x128xi1>
    %26 = vector.broadcast %25 : vector<80x128xi1> to vector<80x128xi1>
    %27 = arith.xori %23, %26 : vector<80x128xi1>
    %28 = arith.andi %27, %21 : vector<80x128xi1>
    %29 = vector.broadcast %17 : i32 to vector<80x128xi32>
    %30 = arith.addi %19, %29 : vector<80x128xi32>
    %31 = arith.select %28, %30, %19 : vector<80x128xi1>, vector<80x128xi32>
    %c8_i32 = arith.constant 8 : i32
    %32 = vector.broadcast %c8_i32 : i32 to vector<80x128xi32>
    %33 = arith.cmpi slt, %31, %32 : vector<80x128xi32>
    %c80_i32 = arith.constant 80 : i32
    %34 = vector.broadcast %c80_i32 : i32 to vector<80x128xi32>
    %35 = arith.cmpi slt, %15, %34 : vector<80x128xi32>
    %36 = arith.andi %33, %35 : vector<80x128xi1>
    %cst_16 = arith.constant 0.000000e+00 : f32
    %37 = vector.broadcast %cst_16 : f32 to vector<80x128xf32>
    %38 = arith.select %36, %12, %37 : vector<80x128xi1>, vector<80x128xf32>
    %39 = arith.truncf %38 : vector<80x128xf32> to vector<80x128xbf16>
    %c11 = arith.constant 11 : index
    %c0_17 = arith.constant 0 : index
    %40 = vector.load %arg9[%c11, %c0_17] : memref<104x128xbf16, #tpu.memory_space<vmem>>, vector<80x128xbf16>
    tpu.vector_store %arg9[%c11, %c0_17], %39 {strides = array<i32>} : memref<104x128xbf16, #tpu.memory_space<vmem>>, vector<80x128xbf16>,
    %c0_18 = arith.constant 0 : index
    %c0_19 = arith.constant 0 : index
    %c0_20 = arith.constant 0 : index
    %41 = vector.load %arg1[%c0_18, %c0_19, %c0_20] : memref<1x80x128xbf16, #tpu.memory_space<vmem>>, vector<1x80x128xbf16>
    %42 = vector.shape_cast %41 : vector<1x80x128xbf16> to vector<80x128xbf16>
    %c0_21 = arith.constant 0 : index
    %c0_22 = arith.constant 0 : index
    %43 = vector.load %arg6[%c0_21, %c0_22] : memref<128x128xbf16, #tpu.memory_space<vmem>>, vector<128x128xbf16>
    %cst_23 = arith.constant dense<0.000000e+00> : vector<80x128xf32>
    %44 = tpu.matmul %42, %43, %cst_23 {dimension_numbers = #tpu.dot_dimension_numbers<[1], [0], [0], [1], [0, 0, 1, 1], [], []>} : vector<80x128xbf16>, vector<128x128xbf16>, vector<80x128xf32> -> vector<80x128xf32>
    %c0_24 = arith.constant 0 : index
    %c0_25 = arith.constant 0 : index
    %45 = vector.load %arg9[%c0_24, %c0_25] : memref<104x128xbf16, #tpu.memory_space<vmem>>, vector<80x128xbf16>
    %c0_26 = arith.constant 0 : index
    %c0_27 = arith.constant 0 : index
    %46 = vector.load %arg4[%c0_26, %c0_27] : memref<1152x128xbf16, #tpu.memory_space<vmem>>, vector<128x128xbf16>
    %cst_28 = arith.constant dense<0.000000e+00> : vector<80x128xf32>
    %47 = tpu.matmul %45, %46, %cst_28 {dimension_numbers = #tpu.dot_dimension_numbers<[1], [0], [0], [1], [0, 0, 1, 1], [], []>} : vector<80x128xbf16>, vector<128x128xbf16>, vector<80x128xf32> -> vector<80x128xf32>
    %48 = arith.addf %44, %47 : vector<80x128xf32>
    %c1 = arith.constant 1 : index
    %c0_29 = arith.constant 0 : index
    %49 = vector.load %arg9[%c1, %c0_29] : memref<104x128xbf16, #tpu.memory_space<vmem>>, vector<80x128xbf16>
    %c128 = arith.constant 128 : index
    %c0_30 = arith.constant 0 : index
    %50 = vector.load %arg4[%c128, %c0_30] : memref<1152x128xbf16, #tpu.memory_space<vmem>>, vector<128x128xbf16>
    %cst_31 = arith.constant dense<0.000000e+00> : vector<80x128xf32>
    %51 = tpu.matmul %49, %50, %cst_31 {dimension_numbers = #tpu.dot_dimension_numbers<[1], [0], [0], [1], [0, 0, 1, 1], [], []>} : vector<80x128xbf16>, vector<128x128xbf16>, vector<80x128xf32> -> vector<80x128xf32>
    %52 = arith.addf %48, %51 : vector<80x128xf32>
    %c2 = arith.constant 2 : index
    %c0_32 = arith.constant 0 : index
    %53 = vector.load %arg9[%c2, %c0_32] : memref<104x128xbf16, #tpu.memory_space<vmem>>, vector<80x128xbf16>
    %c256 = arith.constant 256 : index
    %c0_33 = arith.constant 0 : index
    %54 = vector.load %arg4[%c256, %c0_33] : memref<1152x128xbf16, #tpu.memory_space<vmem>>, vector<128x128xbf16>
    %cst_34 = arith.constant dense<0.000000e+00> : vector<80x128xf32>
    %55 = tpu.matmul %53, %54, %cst_34 {dimension_numbers = #tpu.dot_dimension_numbers<[1], [0], [0], [1], [0, 0, 1, 1], [], []>} : vector<80x128xbf16>, vector<128x128xbf16>, vector<80x128xf32> -> vector<80x128xf32>
    %56 = arith.addf %52, %55 : vector<80x128xf32>
    %c10 = arith.constant 10 : index
    %c0_35 = arith.constant 0 : index
    %57 = vector.load %arg9[%c10, %c0_35] : memref<104x128xbf16, #tpu.memory_space<vmem>>, vector<80x128xbf16>
    %c384 = arith.constant 384 : index
    %c0_36 = arith.constant 0 : index
    %58 = vector.load %arg4[%c384, %c0_36] : memref<1152x128xbf16, #tpu.memory_space<vmem>>, vector<128x128xbf16>
    %cst_37 = arith.constant dense<0.000000e+00> : vector<80x128xf32>
    %59 = tpu.matmul %57, %58, %cst_37 {dimension_numbers = #tpu.dot_dimension_numbers<[1], [0], [0], [1], [0, 0, 1, 1], [], []>} : vector<80x128xbf16>, vector<128x128xbf16>, vector<80x128xf32> -> vector<80x128xf32>
    %60 = arith.addf %56, %59 : vector<80x128xf32>
    %c11_38 = arith.constant 11 : index
    %c0_39 = arith.constant 0 : index
    %61 = vector.load %arg9[%c11_38, %c0_39] : memref<104x128xbf16, #tpu.memory_space<vmem>>, vector<80x128xbf16>
    %c512 = arith.constant 512 : index
    %c0_40 = arith.constant 0 : index
    %62 = vector.load %arg4[%c512, %c0_40] : memref<1152x128xbf16, #tpu.memory_space<vmem>>, vector<128x128xbf16>
    %cst_41 = arith.constant dense<0.000000e+00> : vector<80x128xf32>
    %63 = tpu.matmul %61, %62, %cst_41 {dimension_numbers = #tpu.dot_dimension_numbers<[1], [0], [0], [1], [0, 0, 1, 1], [], []>} : vector<80x128xbf16>, vector<128x128xbf16>, vector<80x128xf32> -> vector<80x128xf32>
    %64 = arith.addf %60, %63 : vector<80x128xf32>
    %c12 = arith.constant 12 : index
    %c0_42 = arith.constant 0 : index
    %65 = vector.load %arg9[%c12, %c0_42] : memref<104x128xbf16, #tpu.memory_space<vmem>>, vector<80x128xbf16>
    %c640 = arith.constant 640 : index
    %c0_43 = arith.constant 0 : index
    %66 = vector.load %arg4[%c640, %c0_43] : memref<1152x128xbf16, #tpu.memory_space<vmem>>, vector<128x128xbf16>
    %cst_44 = arith.constant dense<0.000000e+00> : vector<80x128xf32>
    %67 = tpu.matmul %65, %66, %cst_44 {dimension_numbers = #tpu.dot_dimension_numbers<[1], [0], [0], [1], [0, 0, 1, 1], [], []>} : vector<80x128xbf16>, vector<128x128xbf16>, vector<80x128xf32> -> vector<80x128xf32>
    %68 = arith.addf %64, %67 : vector<80x128xf32>
    %c20 = arith.constant 20 : index
    %c0_45 = arith.constant 0 : index
    %69 = vector.load %arg9[%c20, %c0_45] : memref<104x128xbf16, #tpu.memory_space<vmem>>, vector<80x128xbf16>
    %c768 = arith.constant 768 : index
    %c0_46 = arith.constant 0 : index
    %70 = vector.load %arg4[%c768, %c0_46] : memref<1152x128xbf16, #tpu.memory_space<vmem>>, vector<128x128xbf16>
    %cst_47 = arith.constant dense<0.000000e+00> : vector<80x128xf32>
    %71 = tpu.matmul %69, %70, %cst_47 {dimension_numbers = #tpu.dot_dimension_numbers<[1], [0], [0], [1], [0, 0, 1, 1], [], []>} : vector<80x128xbf16>, vector<128x128xbf16>, vector<80x128xf32> -> vector<80x128xf32>
    %72 = arith.addf %68, %71 : vector<80x128xf32>
    %c21 = arith.constant 21 : index
    %c0_48 = arith.constant 0 : index
    %73 = vector.load %arg9[%c21, %c0_48] : memref<104x128xbf16, #tpu.memory_space<vmem>>, vector<80x128xbf16>
    %c896 = arith.constant 896 : index
    %c0_49 = arith.constant 0 : index
    %74 = vector.load %arg4[%c896, %c0_49] : memref<1152x128xbf16, #tpu.memory_space<vmem>>, vector<128x128xbf16>
    %cst_50 = arith.constant dense<0.000000e+00> : vector<80x128xf32>
    %75 = tpu.matmul %73, %74, %cst_50 {dimension_numbers = #tpu.dot_dimension_numbers<[1], [0], [0], [1], [0, 0, 1, 1], [], []>} : vector<80x128xbf16>, vector<128x128xbf16>, vector<80x128xf32> -> vector<80x128xf32>
    %76 = arith.addf %72, %75 : vector<80x128xf32>
    %c22 = arith.constant 22 : index
    %c0_51 = arith.constant 0 : index
    %77 = vector.load %arg9[%c22, %c0_51] : memref<104x128xbf16, #tpu.memory_space<vmem>>, vector<80x128xbf16>
    %c1024 = arith.constant 1024 : index
    %c0_52 = arith.constant 0 : index
    %78 = vector.load %arg4[%c1024, %c0_52] : memref<1152x128xbf16, #tpu.memory_space<vmem>>, vector<128x128xbf16>
    %cst_53 = arith.constant dense<0.000000e+00> : vector<80x128xf32>
    %79 = tpu.matmul %77, %78, %cst_53 {dimension_numbers = #tpu.dot_dimension_numbers<[1], [0], [0], [1], [0, 0, 1, 1], [], []>} : vector<80x128xbf16>, vector<128x128xbf16>, vector<80x128xf32> -> vector<80x128xf32>
    %80 = arith.addf %76, %79 : vector<80x128xf32>
    %c0_54 = arith.constant 0 : index
    %c0_55 = arith.constant 0 : index
    %81 = vector.load %arg5[%c0_54, %c0_55] : memref<1x128xf32, #tpu.memory_space<vmem>>, vector<1x128xf32>
    %82 = vector.broadcast %81 : vector<1x128xf32> to vector<80x128xf32>
    %83 = arith.addf %80, %82 : vector<80x128xf32>
    %c0_56 = arith.constant 0 : index
    %c0_57 = arith.constant 0 : index
    %84 = vector.load %arg7[%c0_56, %c0_57] : memref<1x128xf32, #tpu.memory_space<vmem>>, vector<1x128xf32>
    %85 = vector.broadcast %84 : vector<1x128xf32> to vector<80x128xf32>
    %86 = arith.addf %83, %85 : vector<80x128xf32>
    %cst_58 = arith.constant 0.000000e+00 : f32
    %87 = vector.broadcast %cst_58 : f32 to vector<80x128xf32>
    %88 = arith.maximumf %86, %87 : vector<80x128xf32>
    %c0_59 = arith.constant 0 : index
    %c0_60 = arith.constant 0 : index
    %c0_61 = arith.constant 0 : index
    %89 = vector.load %arg8[%c0_59, %c0_60, %c0_61] : memref<1x80x128xf32, #tpu.memory_space<vmem>>, vector<1x80x128xf32>
    %90 = vector.shape_cast %89 : vector<1x80x128xf32> to vector<80x128xf32>
    %91 = vector.shape_cast %88 : vector<80x128xf32> to vector<1x80x128xf32>
    tpu.vector_store %arg8[%c0_59, %c0_60, %c0_61], %91 {strides = array<i32>} : memref<1x80x128xf32, #tpu.memory_space<vmem>>, vector<1x80x128xf32>,
    return
  }
  func.func @transform_0(%arg0: i32) -> (i32, i32, i32) {
    %c0_i32 = arith.constant 0 : i32
    %c0_i32_0 = arith.constant 0 : i32
    %c0_i32_1 = arith.constant 0 : i32
    return %arg0, %c0_i32, %c0_i32_0 : i32, i32, i32
  }
  func.func @transform_1(%arg0: i32) -> (i32, i32) {
    %c0_i32 = arith.constant 0 : i32
    %c0_i32_0 = arith.constant 0 : i32
    %c0_i32_1 = arith.constant 0 : i32
    return %c0_i32, %c0_i32_0 : i32, i32
  }
  func.func @transform_2(%arg0: i32) -> (i32, i32) {
    %c0_i32 = arith.constant 0 : i32
    %c0_i32_0 = arith.constant 0 : i32
    %c0_i32_1 = arith.constant 0 : i32
    return %c0_i32, %c0_i32_0 : i32, i32
  }
  func.func @transform_3(%arg0: i32) -> (i32, i32) {
    %c0_i32 = arith.constant 0 : i32
    %c0_i32_0 = arith.constant 0 : i32
    %c0_i32_1 = arith.constant 0 : i32
    return %c0_i32, %c0_i32_0 : i32, i32
  }
  func.func @transform_4(%arg0: i32) -> (i32, i32) {
    %c0_i32 = arith.constant 0 : i32
    %c0_i32_0 = arith.constant 0 : i32
    %c0_i32_1 = arith.constant 0 : i32
    return %c0_i32, %c0_i32_0 : i32, i32
  }
  func.func @transform_5(%arg0: i32) -> (i32, i32) {
    %c0_i32 = arith.constant 0 : i32
    %c0_i32_0 = arith.constant 0 : i32
    %c0_i32_1 = arith.constant 0 : i32
    return %c0_i32, %c0_i32_0 : i32, i32
  }
  func.func @transform_6(%arg0: i32) -> (i32, i32) {
    %c0_i32 = arith.constant 0 : i32
    %c0_i32_0 = arith.constant 0 : i32
    %c0_i32_1 = arith.constant 0 : i32
    return %c0_i32, %c0_i32_0 : i32, i32
  }
  func.func @transform_7(%arg0: i32) -> (i32, i32, i32) {
    %c0_i32 = arith.constant 0 : i32
    %c0_i32_0 = arith.constant 0 : i32
    %c0_i32_1 = arith.constant 0 : i32
    return %arg0, %c0_i32, %c0_i32_0 : i32, i32, i32
  }
}

</mosaic_0001>

<llo_original>
// kernel: residual_block_forward.1
$region0: #{residual_block_forward.1}
  #allocation0 [shape = 'u32[]', space=smem, size = 0x4, offset = 0x4, fixed_abs, tag = 'smem constant byte address 0x4 - core index']
  #allocation1 [shape = 'u32[72,128]{1,0:T(1,128)}', space=vmem, size = 0x9000, scoped, tag = 'internal scratch']
  #allocation2 [shape = 'bf16[104,128]{1,0:T(8,128)(2,1)}', space=vmem, size = 0x6800, scoped, tag = 'scratch operand']
  %s0 = inlined_call_operand.vmem [shape: bf16[2,80,128], index: 0, kind: input, shape index: {}]
  %s1 = inlined_call_operand.vmem [shape: bf16[128,128], index: 1, kind: input, shape index: {}]
  %s2 = inlined_call_operand.vmem [shape: f32[1,128], index: 2, kind: input, shape index: {}]
  %s3 = inlined_call_operand.vmem [shape: bf16[1152,128], index: 3, kind: input, shape index: {}]
  %s4 = inlined_call_operand.vmem [shape: f32[1,128], index: 4, kind: input, shape index: {}]
  %s5 = inlined_call_operand.vmem [shape: bf16[128,128], index: 5, kind: input, shape index: {}]
  %s6 = inlined_call_operand.vmem [shape: f32[1,128], index: 6, kind: input, shape index: {}]
  %s7 = inlined_call_operand.vmem [shape: f32[2,80,128], index: 7, kind: output, shape index: {}]
  %s8 = sld [smem:[#allocation0]]
  $region61: #{residual_block_forward.1} parent=0
    _
  %s10 = ssub.s32 1, %s8
  %s11 = scalar_select 0, %s10, %s8
  loop: start=0, step=1, limit=4
  $region2: #{residual_block_forward.1} parent=0 // loop_pre_header
    _
  $region3: #{residual_block_forward.1} parent=0 // loop_header
    %s13 = sphi 0, %s17
    %p14 = scmp.ge.s32.totalorder %s13, 4
    %s23 = sphi 0, %s25
    %s26 = sphi 0, %s23
    %s27 = sphi 0, %s26
    %s43 = sphi 0, %s27
    %s47 = sphi 0, %s47
    %s49 = sphi 0, %s47
    %s50 = sphi 0, %s49
    %s64 = sphi 0, %s50
    %s68 = sphi 0, %s68
    %s70 = sphi 0, %s68
    %s71 = sphi 0, %s70
    %s85 = sphi 0, %s71
    %s89 = sphi 0, %s89
    %s91 = sphi 0, %s89
    %s92 = sphi 0, %s91
    %s106 = sphi 0, %s92
    %s110 = sphi 0, %s110
    %s112 = sphi 0, %s110
    %s113 = sphi 0, %s112
    %s127 = sphi 0, %s113
    %s131 = sphi 0, %s131
    %s133 = sphi 0, %s131
    %s134 = sphi 0, %s133
    %s148 = sphi 0, %s134
    %s152 = sphi 0, %s152
    %s154 = sphi 0, %s152
    %s155 = sphi 0, %s154
    %s169 = sphi 0, %s155
    %s175 = sphi 0, %s177
    %s178 = sphi 0, %s175
    %s179 = sphi 0, %s178
    %s195 = sphi 0, %s179
  $region4: #{residual_block_forward.1} parent=0 // loop_header_branch
    %16 = sbr.rel (%p14) target = $region8
  $region5: #{residual_block_forward.1} parent=0 // loop_body
    %s18 = ssub.s32 %s13, 1
    %s19 = ssub.s32 %s13, 2
    %s20 = sadd.s32 %s13, 1
    %s21 = ssub.s32 %s13, %s20
    %p22 = scmp.eq.s32.totalorder %s21, 0
    %s24 = sadd.s32 %s23, 1
    %s25 = scalar_select %p22, %s23, %s24
    %p28 = pneg %p22
    %p29 = scmp.eq.s32.totalorder %s13, 1
    %p30 = por %p28, %p29
    %p31 = scmp.ne.s32.totalorder %s23, %s26
    %p32 = scmp.eq.s32.totalorder %s13, 0
    %p33 = por %p31, %p32
    %p34 = scmp.ne.s32.totalorder %s23, %s26
    %p35 = scmp.eq.s32.totalorder %s18, 1
    %p36 = por %p34, %p35
    %p37 = scmp.ne.s32.totalorder %s26, %s27
    %p38 = scmp.eq.s32.totalorder %s18, 0
    %p39 = por %p37, %p38
    %p40 = scmp.ne.s32.totalorder %s26, %s27
    %p41 = scmp.eq.s32.totalorder %s19, 1
    %p42 = por %p40, %p41
    %p44 = scmp.ne.s32.totalorder %s27, %s43
    %p45 = scmp.eq.s32.totalorder %s19, 0
    %p46 = por %p44, %p45
    %s48 = sadd.s32 %s47, 1
    %p51 = scmp.eq.s32.totalorder %s13, 1
    %p52 = scmp.ne.s32.totalorder %s47, %s49
    %p53 = scmp.eq.s32.totalorder %s13, 0
    %p54 = por %p52, %p53
    %p55 = scmp.ne.s32.totalorder %s47, %s49
    %p56 = scmp.eq.s32.totalorder %s18, 1
    %p57 = por %p55, %p56
    %p58 = scmp.ne.s32.totalorder %s49, %s50
    %p59 = scmp.eq.s32.totalorder %s18, 0
    %p60 = por %p58, %p59
    %p61 = scmp.ne.s32.totalorder %s49, %s50
    %p62 = scmp.eq.s32.totalorder %s19, 1
    %p63 = por %p61, %p62
    %p65 = scmp.ne.s32.totalorder %s50, %s64
    %p66 = scmp.eq.s32.totalorder %s19, 0
    %p67 = por %p65, %p66
    %s69 = sadd.s32 %s68, 1
    %p72 = scmp.eq.s32.totalorder %s13, 1
    %p73 = scmp.ne.s32.totalorder %s68, %s70
    %p74 = scmp.eq.s32.totalorder %s13, 0
    %p75 = por %p73, %p74
    %p76 = scmp.ne.s32.totalorder %s68, %s70
    %p77 = scmp.eq.s32.totalorder %s18, 1
    %p78 = por %p76, %p77
    %p79 = scmp.ne.s32.totalorder %s70, %s71
    %p80 = scmp.eq.s32.totalorder %s18, 0
    %p81 = por %p79, %p80
    %p82 = scmp.ne.s32.totalorder %s70, %s71
    %p83 = scmp.eq.s32.totalorder %s19, 1
    %p84 = por %p82, %p83
    %p86 = scmp.ne.s32.totalorder %s71, %s85
    %p87 = scmp.eq.s32.totalorder %s19, 0
    %p88 = por %p86, %p87
    %s90 = sadd.s32 %s89, 1
    %p93 = scmp.eq.s32.totalorder %s13, 1
    %p94 = scmp.ne.s32.totalorder %s89, %s91
    %p95 = scmp.eq.s32.totalorder %s13, 0
    %p96 = por %p94, %p95
    %p97 = scmp.ne.s32.totalorder %s89, %s91
    %p98 = scmp.eq.s32.totalorder %s18, 1
    %p99 = por %p97, %p98
    %p100 = scmp.ne.s32.totalorder %s91, %s92
    %p101 = scmp.eq.s32.totalorder %s18, 0
    %p102 = por %p100, %p101
    %p103 = scmp.ne.s32.totalorder %s91, %s92
    %p104 = scmp.eq.s32.totalorder %s19, 1
    %p105 = por %p103, %p104
    %p107 = scmp.ne.s32.totalorder %s92, %s106
    %p108 = scmp.eq.s32.totalorder %s19, 0
    %p109 = por %p107, %p108
    %s111 = sadd.s32 %s110, 1
    %p114 = scmp.eq.s32.totalorder %s13, 1
    %p115 = scmp.ne.s32.totalorder %s110, %s112
    %p116 = scmp.eq.s32.totalorder %s13, 0
    %p117 = por %p115, %p116
    %p118 = scmp.ne.s32.totalorder %s110, %s112
    %p119 = scmp.eq.s32.totalorder %s18, 1
    %p120 = por %p118, %p119
    %p121 = scmp.ne.s32.totalorder %s112, %s113
    %p122 = scmp.eq.s32.totalorder %s18, 0
    %p123 = por %p121, %p122
    %p124 = scmp.ne.s32.totalorder %s112, %s113
    %p125 = scmp.eq.s32.totalorder %s19, 1
    %p126 = por %p124, %p125
    %p128 = scmp.ne.s32.totalorder %s113, %s127
    %p129 = scmp.eq.s32.totalorder %s19, 0
    %p130 = por %p128, %p129
    %s132 = sadd.s32 %s131, 1
    %p135 = scmp.eq.s32.totalorder %s13, 1
    %p136 = scmp.ne.s32.totalorder %s131, %s133
    %p137 = scmp.eq.s32.totalorder %s13, 0
    %p138 = por %p136, %p137
    %p139 = scmp.ne.s32.totalorder %s131, %s133
    %p140 = scmp.eq.s32.totalorder %s18, 1
    %p141 = por %p139, %p140
    %p142 = scmp.ne.s32.totalorder %s133, %s134
    %p143 = scmp.eq.s32.totalorder %s18, 0
    %p144 = por %p142, %p143
    %p145 = scmp.ne.s32.totalorder %s133, %s134
    %p146 = scmp.eq.s32.totalorder %s19, 1
    %p147 = por %p145, %p146
    %p149 = scmp.ne.s32.totalorder %s134, %s148
    %p150 = scmp.eq.s32.totalorder %s19, 0
    %p151 = por %p149, %p150
    %s153 = sadd.s32 %s152, 1
    %p156 = scmp.eq.s32.totalorder %s13, 1
    %p157 = scmp.ne.s32.totalorder %s152, %s154
    %p158 = scmp.eq.s32.totalorder %s13, 0
    %p159 = por %p157, %p158
    %p160 = scmp.ne.s32.totalorder %s152, %s154
    %p161 = scmp.eq.s32.totalorder %s18, 1
    %p162 = por %p160, %p161
    %p163 = scmp.ne.s32.totalorder %s154, %s155
    %p164 = scmp.eq.s32.totalorder %s18, 0
    %p165 = por %p163, %p164
    %p166 = scmp.ne.s32.totalorder %s154, %s155
    %p167 = scmp.eq.s32.totalorder %s19, 1
    %p168 = por %p166, %p167
    %p170 = scmp.ne.s32.totalorder %s155, %s169
    %p171 = scmp.eq.s32.totalorder %s19, 0
    %p172 = por %p170, %p171
    %s173 = ssub.s32 %s13, %s20
    %p174 = scmp.eq.s32.totalorder %s173, 0
    %s176 = sadd.s32 %s175, 1
    %s177 = scalar_select %p174, %s175, %s176
    %p180 = pneg %p174
    %p181 = scmp.eq.s32.totalorder %s13, 1
    %p182 = por %p180, %p181
    %p183 = scmp.ne.s32.totalorder %s175, %s178
    %p184 = scmp.eq.s32.totalorder %s13, 0
    %p185 = por %p183, %p184
    %p186 = scmp.ne.s32.totalorder %s175, %s178
    %p187 = scmp.eq.s32.totalorder %s18, 1
    %p188 = por %p186, %p187
    %p189 = scmp.ne.s32.totalorder %s178, %s179
    %p190 = scmp.eq.s32.totalorder %s18, 0
    %p191 = por %p189, %p190
    %p192 = scmp.ne.s32.totalorder %s178, %s179
    %p193 = scmp.eq.s32.totalorder %s19, 1
    %p194 = por %p192, %p193
    %p196 = scmp.ne.s32.totalorder %s179, %s195
    %p197 = scmp.eq.s32.totalorder %s19, 0
    %p198 = por %p196, %p197
    %p199 = scmp.le.s32.totalorder 1, %s13
    %p200 = scmp.lt.s32.totalorder %s13, 3
    %p201 = pnand %p199, %p200
    %p202 = pneg %p201
    // Predicated region
    $region9: #{residual_block_forward.1} parent=5 // pred_check
      _
    $region10: #{residual_block_forward.1} parent=5 // pred_check_branch
      %204 = sbr.rel (%p201) target = $region12
    $region11: #{residual_block_forward.1} parent=5 // pred_region
      %s205 = ssub.s32 %s13, 1
      // Predicated region
      $region13: #{residual_block_forward.1} parent=11 // pred_check
        %p206 = pneg %p60
      $region14: #{residual_block_forward.1} parent=11 // pred_check_branch
        %208 = sbr.rel (%p206) target = $region16
      $region15: #{residual_block_forward.1} parent=11 // pred_region
        _
      $region16: #{residual_block_forward.1} parent=11 // pred_fallthru
        _
      // Predicated region
      $region17: #{residual_block_forward.1} parent=11 // pred_check
        %p209 = pneg %p81
      $region18: #{residual_block_forward.1} parent=11 // pred_check_branch
        %211 = sbr.rel (%p209) target = $region20
      $region19: #{residual_block_forward.1} parent=11 // pred_region
        _
      $region20: #{residual_block_forward.1} parent=11 // pred_fallthru
        _
      // Predicated region
      $region21: #{residual_block_forward.1} parent=11 // pred_check
        %p212 = pneg %p102
      $region22: #{residual_block_forward.1} parent=11 // pred_check_branch
        %214 = sbr.rel (%p212) target = $region24
      $region23: #{residual_block_forward.1} parent=11 // pred_region
        _
      $region24: #{residual_block_forward.1} parent=11 // pred_fallthru
        _
      // Predicated region
      $region25: #{residual_block_forward.1} parent=11 // pred_check
        %p215 = pneg %p123
      $region26: #{residual_block_forward.1} parent=11 // pred_check_branch
        %217 = sbr.rel (%p215) target = $region28
      $region27: #{residual_block_forward.1} parent=11 // pred_region
        _
      $region28: #{residual_block_forward.1} parent=11 // pred_fallthru
        _
      // Predicated region
      $region29: #{residual_block_forward.1} parent=11 // pred_check
        %p218 = pneg %p144
      $region30: #{residual_block_forward.1} parent=11 // pred_check_branch
        %220 = sbr.rel (%p218) target = $region32
      $region31: #{residual_block_forward.1} parent=11 // pred_region
        _
      $region32: #{residual_block_forward.1} parent=11 // pred_fallthru
        _
      // Predicated region
      $region33: #{residual_block_forward.1} parent=11 // pred_check
        %p221 = pneg %p165
      $region34: #{residual_block_forward.1} parent=11 // pred_check_branch
        %223 = sbr.rel (%p221) target = $region36
      $region35: #{residual_block_forward.1} parent=11 // pred_region
        _
      $region36: #{residual_block_forward.1} parent=11 // pred_fallthru
        _
    $region12: #{residual_block_forward.1} parent=5 // pred_fallthru
      _
    %p224 = scmp.lt.s32.totalorder %s13, 2
    // Predicated region
    $region37: #{residual_block_forward.1} parent=5 // pred_check
      %p225 = pneg %p224
    $region38: #{residual_block_forward.1} parent=5 // pred_check_branch
      %227 = sbr.rel (%p225) target = $region40
    $region39: #{residual_block_forward.1} parent=5 // pred_region
      // Predicated region
      $region41: #{residual_block_forward.1} parent=39 // pred_check
        %p228 = pneg %p33
      $region42: #{residual_block_forward.1} parent=39 // pred_check_branch
        %230 = sbr.rel (%p228) target = $region44
      $region43: #{residual_block_forward.1} parent=39 // pred_region
        %p231 = scmp.lt.s32.totalorder %s13, 1
        %s232 = scalar_select %p231, %s13, 1
        %s233 = smul.addr %s232, 10
        %s234 = smul.addr %s233, 4
        %s235 = scalar_lea.vmem %s0, %s234
      $region44: #{residual_block_forward.1} parent=39 // pred_fallthru
        _
    $region40: #{residual_block_forward.1} parent=5 // pred_fallthru
      _
    %p236 = scmp.le.s32.totalorder 1, %s13
    %p237 = scmp.lt.s32.totalorder %s13, 3
    %p238 = pnand %p236, %p237
    %p239 = pneg %p238
    // Predicated region
    $region45: #{residual_block_forward.1} parent=5 // pred_check
      _
    $region46: #{residual_block_forward.1} parent=5 // pred_check_branch
      %241 = sbr.rel (%p238) target = $region48
    $region47: #{residual_block_forward.1} parent=5 // pred_region
      %s242 = ssub.s32 %s13, 1
      %p243 = scmp.lt.s32.totalorder %s18, 1
      %s244 = scalar_select %p243, %s18, 1
      %s245 = smul.addr %s244, 10
      %s246 = smul.addr %s245, 4
      %s247 = scalar_lea.vmem %s0, %s246
      %p248 = pneg %p39
      %p249 = pneg %p36
      %p250 = pneg %p60
      %p251 = pneg %p57
      %p252 = pneg %p81
      %p253 = pneg %p78
      %p254 = pneg %p102
      %p255 = pneg %p99
      %p256 = pneg %p123
      %p257 = pneg %p120
      %p258 = pneg %p144
      %p259 = pneg %p141
      %p260 = pneg %p165
      %p261 = pneg %p162
      %p262 = pneg %p191
      %p263 = pneg %p188
      %p264 = scmp.lt.s32.totalorder %s18, 1
      %s265 = scalar_select %p264, %s18, 1
      %s266 = smul.addr %s265, 10
      %s267 = smul.addr %s266, 8
      %s268 = scalar_lea.vmem %s7, %s267
      %p269 = scmp.lt.s32.totalorder %s18, 1
      %s270 = scalar_select %p269, %s18, 1
      %s271 = smul.addr %s270, 10
      %s272 = smul.addr %s271, 4
      %s273 = scalar_lea.vmem %s0, %s272
      %p274 = scmp.lt.s32.totalorder %s18, 1
      %s275 = scalar_select %p274, %s18, 1
      %s276 = smul.addr %s275, 10
      %s277 = smul.addr %s276, 8
      %s278 = scalar_lea.vmem %s7, %s277
      %280 = vst [vmem:[#allocation2] sm:$0xf] 0
      %vm281 = vcmask 1041408
      %vm282 = vsmask.f32 1280
      %vm283 = vmand %vm281, %vm282
      %v284 = vld [vmem:[#allocation2 + $0x4] sm:$0x3]
      %v285 = vsel %vm283, 0, %v284
      %286 = vst [vmem:[#allocation2 + $0x4] sm:$0x3] %v285
      %vm287 = vcmask 1043457
      %vm288 = vsmask.f32 7942
      %vm289 = vmand %vm287, %vm288
      %v290 = vld [vmem:[#allocation2 + $0x2c] sm:$0xe]
      %v291 = vsel %vm289, 0, %v290
      %292 = vst [vmem:[#allocation2 + $0x2c] sm:$0xe] %v291
      %293 = vst [vmem:[#allocation2 + $0x30] sm:$0xf] 0
      %v294 = vld [vmem:[%s273] sm:$0xf]
      %v295 = vld [vmem:[%s273 + $0x4] sm:$0xf]
      %v296 = vld [vmem:[%s273 + $0x8] sm:$0xf]
      %v297 = vld [vmem:[%s273 + $0xc] sm:$0xf]
      %v298 = vld [vmem:[%s273 + $0x10] sm:$0xf]
      %v299 = vld [vmem:[%s273 + $0x14] sm:$0xf]
      %v300 = vld [vmem:[%s273 + $0x18] sm:$0xf]
      %v301 = vld [vmem:[%s273 + $0x1c] sm:$0xf]
      %v302 = vld [vmem:[%s273 + $0x20] sm:$0xf]
      %v303 = vld [vmem:[%s273 + $0x24] sm:$0xf]
      %v304 = vld [vmem:[%s1] sm:$0xf]
      %v305 = vld [vmem:[%s1 + $0x4] sm:$0xf]
      %v306 = vld [vmem:[%s1 + $0x8] sm:$0xf]
      %v307 = vld [vmem:[%s1 + $0xc] sm:$0xf]
      %v308 = vld [vmem:[%s1 + $0x10] sm:$0xf]
      %v309 = vld [vmem:[%s1 + $0x14] sm:$0xf]
      %v310 = vld [vmem:[%s1 + $0x18] sm:$0xf]
      %v311 = vld [vmem:[%s1 + $0x1c] sm:$0xf]
      %v312 = vld [vmem:[%s1 + $0x20] sm:$0xf]
      %v313 = vld [vmem:[%s1 + $0x24] sm:$0xf]
      %v314 = vld [vmem:[%s1 + $0x28] sm:$0xf]
      %v315 = vld [vmem:[%s1 + $0x2c] sm:$0xf]
      %v316 = vld [vmem:[%s1 + $0x30] sm:$0xf]
      %v317 = vld [vmem:[%s1 + $0x34] sm:$0xf]
      %v318 = vld [vmem:[%s1 + $0x38] sm:$0xf]
      %v319 = vld [vmem:[%s1 + $0x3c] sm:$0xf]
      %v320 = vld [vmem:[%s2] sm:$0x1]
      %v322 = vperm.slane %v320, 0
      %v334 = vunpack.c.l.b16 %v294
      %v335 = vunpack.c.l.b16 %v295
      %v336 = vunpack.c.l.b16 %v296
      %v337 = vunpack.c.l.b16 %v297
      %v338 = vunpack.c.l.b16 %v298
      %v339 = vunpack.c.l.b16 %v299
      %v340 = vunpack.c.l.b16 %v300
      %v341 = vunpack.c.l.b16 %v301
      %v342 = vunpack.c.l.b16 %v302
      %v343 = vunpack.c.l.b16 %v303
      %v344 = vpack.c.b16 %v335, %v334
      %v345 = vpack.c.b16 %v337, %v336
      %v346 = vpack.c.b16 %v339, %v338
      %v347 = vpack.c.b16 %v341, %v340
      %v348 = vpack.c.b16 %v343, %v342
      %v370 = vunpack.c.l.b16 %v304
      %v371 = vunpack.c.l.b16 %v305
      %v372 = vunpack.c.l.b16 %v306
      %v373 = vunpack.c.l.b16 %v307
      %v374 = vunpack.c.l.b16 %v308
      %v375 = vunpack.c.l.b16 %v309
      %v376 = vunpack.c.l.b16 %v310
      %v377 = vunpack.c.l.b16 %v311
      %v378 = vunpack.c.l.b16 %v312
      %v379 = vunpack.c.l.b16 %v313
      %v380 = vunpack.c.l.b16 %v314
      %v381 = vunpack.c.l.b16 %v315
      %v382 = vunpack.c.l.b16 %v316
      %v383 = vunpack.c.l.b16 %v317
      %v384 = vunpack.c.l.b16 %v318
      %v385 = vunpack.c.l.b16 %v319
      %v386 = vpack.c.b16 %v371, %v370
      %v387 = vpack.c.b16 %v373, %v372
      %v388 = vpack.c.b16 %v375, %v374
      %v389 = vpack.c.b16 %v377, %v376
      %v390 = vpack.c.b16 %v379, %v378
      %v391 = vpack.c.b16 %v381, %v380
      %v392 = vpack.c.b16 %v383, %v382
      %v393 = vpack.c.b16 %v385, %v384
      %402 = vmatpush.bf16.msra.mxu0 %v393
      %403 = vmatpush.bf16.msra.mxu0 %v392
      %404 = vmatpush.bf16.msra.mxu0 %v391
      %405 = vmatpush.bf16.msra.mxu0 %v390
      %406 = vmatpush.bf16.msra.mxu0 %v389
      %407 = vmatpush.bf16.msra.mxu0 %v388
      %408 = vmatpush.bf16.msra.mxu0 %v387
      %409 = vmatpush.bf16.msra.mxu0 %v386
      %410 = vmatmul.bf16.gmra.mxu0 %v344
      %v411 = vpop.f32.mrf.mxu0
      %v412 = vadd.f32 %v322, %v411
      %v413 = vpop.f32.mrf.mxu0
      %v414 = vadd.f32 %v322, %v413
      %415 = vmatmul.bf16.gmra.mxu0 %v345
      %v416 = vpop.f32.mrf.mxu0
      %v417 = vadd.f32 %v322, %v416
      %v418 = vpop.f32.mrf.mxu0
      %v419 = vadd.f32 %v322, %v418
      %420 = vmatmul.bf16.gmra.mxu0 %v346
      %v421 = vpop.f32.mrf.mxu0
      %v422 = vadd.f32 %v322, %v421
      %v423 = vpop.f32.mrf.mxu0
      %v424 = vadd.f32 %v322, %v423
      %425 = vmatmul.bf16.gmra.mxu0 %v347
      %v426 = vpop.f32.mrf.mxu0
      %v427 = vadd.f32 %v322, %v426
      %v428 = vpop.f32.mrf.mxu0
      %v429 = vadd.f32 %v322, %v428
      %430 = vmatmul.bf16.gmra.mxu0 %v348
      %v431 = vpop.f32.mrf.mxu0
      %v432 = vadd.f32 %v322, %v431
      %v433 = vpop.f32.mrf.mxu0
      %v434 = vadd.f32 %v322, %v433
      %435 = vdwg.mxu0
      %v436 = vmax.f32 %v412, 0.0
      %v437 = vmax.f32 %v414, 0.0
      %v438 = vmax.f32 %v417, 0.0
      %v439 = vmax.f32 %v419, 0.0
      %v440 = vmax.f32 %v422, 0.0
      %v441 = vmax.f32 %v424, 0.0
      %v442 = vmax.f32 %v427, 0.0
      %v443 = vmax.f32 %v429, 0.0
      %v444 = vmax.f32 %v432, 0.0
      %v445 = vmax.f32 %v434, 0.0
      %v446 = vlaneseq
      %v447 = vshrl.u32 %v446, 7
      %v448 = vadd.s32 %v447, 8
      %v449 = vadd.s32 %v447, 16
      %v450 = vadd.s32 %v447, 24
      %v451 = vadd.s32 %v447, 32
      %v452 = vadd.s32 %v447, 40
      %v453 = vadd.s32 %v447, 48
      %v454 = vadd.s32 %v447, 56
      %v455 = vadd.s32 %v447, 64
      %v456 = vadd.s32 %v447, 72
      %vm457 = vcmp.lt.s32.totalorder %v447, 0
      %v458 = vsub.s32 0, %v447
      %v459 = vsel %vm457, %v458, %v447
      %v460 = vand.u32 %v459, 65535
      %v461 = vshrl.u32 %v459, 16
      %v463 = vmul.u32 %v460, 52429
      %v464 = vmul.u32 %v460, 52428
      %v465 = vmul.u32 %v461, 52429
      %v466 = vmul.u32 %v461, 52428
      %v467 = vshll.u32 %v464, 16
      %v468 = vshrl.u32 %v464, 16
      %v469 = vshll.u32 %v465, 16
      %v470 = vshrl.u32 %v465, 16
      %vm471 = vc.u32 %v463, %v467
      %v472 = vsel %vm471, 1, 0
      %v473 = vadd.s32 %v463, %v467
      %v474 = vadd.s32 %v466, %v472
      %vm475 = vc.u32 %v473, %v469
      %v476 = vsel %vm475, 1, 0
      %v477 = vadd.s32 %v473, %v469
      %v478 = vadd.s32 %v474, %v476
      %v479 = vadd.s32 %v478, %v468
      %v480 = vadd.s32 %v479, %v470
      %v481 = vshrl.u32 %v480, 3
      %v482 = vmul.u32 %v481, 10
      %v483 = vsub.s32 %v459, %v482
      %v484 = vsub.s32 0, %v483
      %v485 = vsel %vm457, %v484, %v483
      %vm486 = vcmp.lt.s32.totalorder %v448, 0
      %v487 = vsub.s32 0, %v448
      %v488 = vsel %vm486, %v487, %v448
      %v489 = vand.u32 %v488, 65535
      %v490 = vshrl.u32 %v488, 16
      %v492 = vmul.u32 %v489, 52429
      %v493 = vmul.u32 %v489, 52428
      %v494 = vmul.u32 %v490, 52429
      %v495 = vmul.u32 %v490, 52428
      %v496 = vshll.u32 %v493, 16
      %v497 = vshrl.u32 %v493, 16
      %v498 = vshll.u32 %v494, 16
      %v499 = vshrl.u32 %v494, 16
      %vm500 = vc.u32 %v492, %v496
      %v501 = vsel %vm500, 1, 0
      %v502 = vadd.s32 %v492, %v496
      %v503 = vadd.s32 %v495, %v501
      %vm504 = vc.u32 %v502, %v498
      %v505 = vsel %vm504, 1, 0
      %v506 = vadd.s32 %v502, %v498
      %v507 = vadd.s32 %v503, %v505
      %v508 = vadd.s32 %v507, %v497
      %v509 = vadd.s32 %v508, %v499
      %v510 = vshrl.u32 %v509, 3
      %v511 = vmul.u32 %v510, 10
      %v512 = vsub.s32 %v488, %v511
      %v513 = vsub.s32 0, %v512
      %v514 = vsel %vm486, %v513, %v512
      %vm515 = vcmp.lt.s32.totalorder %v449, 0
      %v516 = vsub.s32 0, %v449
      %v517 = vsel %vm515, %v516, %v449
      %v518 = vand.u32 %v517, 65535
      %v519 = vshrl.u32 %v517, 16
      %v521 = vmul.u32 %v518, 52429
      %v522 = vmul.u32 %v518, 52428
      %v523 = vmul.u32 %v519, 52429
      %v524 = vmul.u32 %v519, 52428
      %v525 = vshll.u32 %v522, 16
      %v526 = vshrl.u32 %v522, 16
      %v527 = vshll.u32 %v523, 16
      %v528 = vshrl.u32 %v523, 16
      %vm529 = vc.u32 %v521, %v525
      %v530 = vsel %vm529, 1, 0
      %v531 = vadd.s32 %v521, %v525
      %v532 = vadd.s32 %v524, %v530
      %vm533 = vc.u32 %v531, %v527
      %v534 = vsel %vm533, 1, 0
      %v535 = vadd.s32 %v531, %v527
      %v536 = vadd.s32 %v532, %v534
      %v537 = vadd.s32 %v536, %v526
      %v538 = vadd.s32 %v537, %v528
      %v539 = vshrl.u32 %v538, 3
      %v540 = vmul.u32 %v539, 10
      %v541 = vsub.s32 %v517, %v540
      %v542 = vsub.s32 0, %v541
      %v543 = vsel %vm515, %v542, %v541
      %vm544 = vcmp.lt.s32.totalorder %v450, 0
      %v545 = vsub.s32 0, %v450
      %v546 = vsel %vm544, %v545, %v450
      %v547 = vand.u32 %v546, 65535
      %v548 = vshrl.u32 %v546, 16
      %v550 = vmul.u32 %v547, 52429
      %v551 = vmul.u32 %v547, 52428
      %v552 = vmul.u32 %v548, 52429
      %v553 = vmul.u32 %v548, 52428
      %v554 = vshll.u32 %v551, 16
      %v555 = vshrl.u32 %v551, 16
      %v556 = vshll.u32 %v552, 16
      %v557 = vshrl.u32 %v552, 16
      %vm558 = vc.u32 %v550, %v554
      %v559 = vsel %vm558, 1, 0
      %v560 = vadd.s32 %v550, %v554
      %v561 = vadd.s32 %v553, %v559
      %vm562 = vc.u32 %v560, %v556
      %v563 = vsel %vm562, 1, 0
      %v564 = vadd.s32 %v560, %v556
      %v565 = vadd.s32 %v561, %v563
      %v566 = vadd.s32 %v565, %v555
      %v567 = vadd.s32 %v566, %v557
      %v568 = vshrl.u32 %v567, 3
      %v569 = vmul.u32 %v568, 10
      %v570 = vsub.s32 %v546, %v569
      %v571 = vsub.s32 0, %v570
      %v572 = vsel %vm544, %v571, %v570
      %vm573 = vcmp.lt.s32.totalorder %v451, 0
      %v574 = vsub.s32 0, %v451
      %v575 = vsel %vm573, %v574, %v451
      %v576 = vand.u32 %v575, 65535
      %v577 = vshrl.u32 %v575, 16
      %v579 = vmul.u32 %v576, 52429
      %v580 = vmul.u32 %v576, 52428
      %v581 = vmul.u32 %v577, 52429
      %v582 = vmul.u32 %v577, 52428
      %v583 = vshll.u32 %v580, 16
      %v584 = vshrl.u32 %v580, 16
      %v585 = vshll.u32 %v581, 16
      %v586 = vshrl.u32 %v581, 16
      %vm587 = vc.u32 %v579, %v583
      %v588 = vsel %vm587, 1, 0
      %v589 = vadd.s32 %v579, %v583
      %v590 = vadd.s32 %v582, %v588
      %vm591 = vc.u32 %v589, %v585
      %v592 = vsel %vm591, 1, 0
      %v593 = vadd.s32 %v589, %v585
      %v594 = vadd.s32 %v590, %v592
      %v595 = vadd.s32 %v594, %v584
      %v596 = vadd.s32 %v595, %v586
      %v597 = vshrl.u32 %v596, 3
      %v598 = vmul.u32 %v597, 10
      %v599 = vsub.s32 %v575, %v598
      %v600 = vsub.s32 0, %v599
      %v601 = vsel %vm573, %v600, %v599
      %vm602 = vcmp.lt.s32.totalorder %v452, 0
      %v603 = vsub.s32 0, %v452
      %v604 = vsel %vm602, %v603, %v452
      %v605 = vand.u32 %v604, 65535
      %v606 = vshrl.u32 %v604, 16
      %v608 = vmul.u32 %v605, 52429
      %v609 = vmul.u32 %v605, 52428
      %v610 = vmul.u32 %v606, 52429
      %v611 = vmul.u32 %v606, 52428
      %v612 = vshll.u32 %v609, 16
      %v613 = vshrl.u32 %v609, 16
      %v614 = vshll.u32 %v610, 16
      %v615 = vshrl.u32 %v610, 16
      %vm616 = vc.u32 %v608, %v612
      %v617 = vsel %vm616, 1, 0
      %v618 = vadd.s32 %v608, %v612
      %v619 = vadd.s32 %v611, %v617
      %vm620 = vc.u32 %v618, %v614
      %v621 = vsel %vm620, 1, 0
      %v622 = vadd.s32 %v618, %v614
      %v623 = vadd.s32 %v619, %v621
      %v624 = vadd.s32 %v623, %v613
      %v625 = vadd.s32 %v624, %v615
      %v626 = vshrl.u32 %v625, 3
      %v627 = vmul.u32 %v626, 10
      %v628 = vsub.s32 %v604, %v627
      %v629 = vsub.s32 0, %v628
      %v630 = vsel %vm602, %v629, %v628
      %vm631 = vcmp.lt.s32.totalorder %v453, 0
      %v632 = vsub.s32 0, %v453
      %v633 = vsel %vm631, %v632, %v453
      %v634 = vand.u32 %v633, 65535
      %v635 = vshrl.u32 %v633, 16
      %v637 = vmul.u32 %v634, 52429
      %v638 = vmul.u32 %v634, 52428
      %v639 = vmul.u32 %v635, 52429
      %v640 = vmul.u32 %v635, 52428
      %v641 = vshll.u32 %v638, 16
      %v642 = vshrl.u32 %v638, 16
      %v643 = vshll.u32 %v639, 16
      %v644 = vshrl.u32 %v639, 16
      %vm645 = vc.u32 %v637, %v641
      %v646 = vsel %vm645, 1, 0
      %v647 = vadd.s32 %v637, %v641
      %v648 = vadd.s32 %v640, %v646
      %vm649 = vc.u32 %v647, %v643
      %v650 = vsel %vm649, 1, 0
      %v651 = vadd.s32 %v647, %v643
      %v652 = vadd.s32 %v648, %v650
      %v653 = vadd.s32 %v652, %v642
      %v654 = vadd.s32 %v653, %v644
      %v655 = vshrl.u32 %v654, 3
      %v656 = vmul.u32 %v655, 10
      %v657 = vsub.s32 %v633, %v656
      %v658 = vsub.s32 0, %v657
      %v659 = vsel %vm631, %v658, %v657
      %vm660 = vcmp.lt.s32.totalorder %v454, 0
      %v661 = vsub.s32 0, %v454
      %v662 = vsel %vm660, %v661, %v454
      %v663 = vand.u32 %v662, 65535
      %v664 = vshrl.u32 %v662, 16
      %v666 = vmul.u32 %v663, 52429
      %v667 = vmul.u32 %v663, 52428
      %v668 = vmul.u32 %v664, 52429
      %v669 = vmul.u32 %v664, 52428
      %v670 = vshll.u32 %v667, 16
      %v671 = vshrl.u32 %v667, 16
      %v672 = vshll.u32 %v668, 16
      %v673 = vshrl.u32 %v668, 16
      %vm674 = vc.u32 %v666, %v670
      %v675 = vsel %vm674, 1, 0
      %v676 = vadd.s32 %v666, %v670
      %v677 = vadd.s32 %v669, %v675
      %vm678 = vc.u32 %v676, %v672
      %v679 = vsel %vm678, 1, 0
      %v680 = vadd.s32 %v676, %v672
      %v681 = vadd.s32 %v677, %v679
      %v682 = vadd.s32 %v681, %v671
      %v683 = vadd.s32 %v682, %v673
      %v684 = vshrl.u32 %v683, 3
      %v685 = vmul.u32 %v684, 10
      %v686 = vsub.s32 %v662, %v685
      %v687 = vsub.s32 0, %v686
      %v688 = vsel %vm660, %v687, %v686
      %vm689 = vcmp.lt.s32.totalorder %v455, 0
      %v690 = vsub.s32 0, %v455
      %v691 = vsel %vm689, %v690, %v455
      %v692 = vand.u32 %v691, 65535
      %v693 = vshrl.u32 %v691, 16
      %v695 = vmul.u32 %v692, 52429
      %v696 = vmul.u32 %v692, 52428
      %v697 = vmul.u32 %v693, 52429
      %v698 = vmul.u32 %v693, 52428
      %v699 = vshll.u32 %v696, 16
      %v700 = vshrl.u32 %v696, 16
      %v701 = vshll.u32 %v697, 16
      %v702 = vshrl.u32 %v697, 16
      %vm703 = vc.u32 %v695, %v699
      %v704 = vsel %vm703, 1, 0
      %v705 = vadd.s32 %v695, %v699
      %v706 = vadd.s32 %v698, %v704
      %vm707 = vc.u32 %v705, %v701
      %v708 = vsel %vm707, 1, 0
      %v709 = vadd.s32 %v705, %v701
      %v710 = vadd.s32 %v706, %v708
      %v711 = vadd.s32 %v710, %v700
      %v712 = vadd.s32 %v711, %v702
      %v713 = vshrl.u32 %v712, 3
      %v714 = vmul.u32 %v713, 10
      %v715 = vsub.s32 %v691, %v714
      %v716 = vsub.s32 0, %v715
      %v717 = vsel %vm689, %v716, %v715
      %vm718 = vcmp.lt.s32.totalorder %v456, 0
      %v719 = vsub.s32 0, %v456
      %v720 = vsel %vm718, %v719, %v456
      %v721 = vand.u32 %v720, 65535
      %v722 = vshrl.u32 %v720, 16
      %v724 = vmul.u32 %v721, 52429
      %v725 = vmul.u32 %v721, 52428
      %v726 = vmul.u32 %v722, 52429
      %v727 = vmul.u32 %v722, 52428
      %v728 = vshll.u32 %v725, 16
      %v729 = vshrl.u32 %v725, 16
      %v730 = vshll.u32 %v726, 16
      %v731 = vshrl.u32 %v726, 16
      %vm732 = vc.u32 %v724, %v728
      %v733 = vsel %vm732, 1, 0
      %v734 = vadd.s32 %v724, %v728
      %v735 = vadd.s32 %v727, %v733
      %vm736 = vc.u32 %v734, %v730
      %v737 = vsel %vm736, 1, 0
      %v738 = vadd.s32 %v734, %v730
      %v739 = vadd.s32 %v735, %v737
      %v740 = vadd.s32 %v739, %v729
      %v741 = vadd.s32 %v740, %v731
      %v742 = vshrl.u32 %v741, 3
      %v743 = vmul.u32 %v742, 10
      %v744 = vsub.s32 %v720, %v743
      %v745 = vsub.s32 0, %v744
      %v746 = vsel %vm718, %v745, %v744
      %vm747 = vcmp.ne.s32.totalorder %v485, 0
      %vm748 = vcmp.ne.s32.totalorder %v514, 0
      %vm749 = vcmp.ne.s32.totalorder %v543, 0
      %vm750 = vcmp.ne.s32.totalorder %v572, 0
      %vm751 = vcmp.ne.s32.totalorder %v601, 0
      %vm752 = vcmp.ne.s32.totalorder %v630, 0
      %vm753 = vcmp.ne.s32.totalorder %v659, 0
      %vm754 = vcmp.ne.s32.totalorder %v688, 0
      %vm755 = vcmp.ne.s32.totalorder %v717, 0
      %vm756 = vcmp.ne.s32.totalorder %v746, 0
      %vm757 = vcmp.lt.s32.totalorder %v485, 0
      %vm758 = vcmp.lt.s32.totalorder %v514, 0
      %vm759 = vcmp.lt.s32.totalorder %v543, 0
      %vm760 = vcmp.lt.s32.totalorder %v572, 0
      %vm761 = vcmp.lt.s32.totalorder %v601, 0
      %vm762 = vcmp.lt.s32.totalorder %v630, 0
      %vm763 = vcmp.lt.s32.totalorder %v659, 0
      %vm764 = vcmp.lt.s32.totalorder %v688, 0
      %vm765 = vcmp.lt.s32.totalorder %v717, 0
      %vm766 = vcmp.lt.s32.totalorder %v746, 0
      %vm767 = vmand %vm757, %vm747
      %vm768 = vmand %vm758, %vm748
      %vm769 = vmand %vm759, %vm749
      %vm770 = vmand %vm760, %vm750
      %vm771 = vmand %vm761, %vm751
      %vm772 = vmand %vm762, %vm752
      %vm773 = vmand %vm763, %vm753
      %vm774 = vmand %vm764, %vm754
      %vm775 = vmand %vm765, %vm755
      %vm776 = vmand %vm766, %vm756
      %v777 = vadd.s32 %v485, 10
      %v778 = vadd.s32 %v514, 10
      %v779 = vadd.s32 %v543, 10
      %v780 = vadd.s32 %v572, 10
      %v781 = vadd.s32 %v601, 10
      %v782 = vadd.s32 %v630, 10
      %v783 = vadd.s32 %v659, 10
      %v784 = vadd.s32 %v688, 10
      %v785 = vadd.s32 %v717, 10
      %v786 = vadd.s32 %v746, 10
      %v787 = vsel %vm767, %v777, %v485
      %v788 = vsel %vm768, %v778, %v514
      %v789 = vsel %vm769, %v779, %v543
      %v790 = vsel %vm770, %v780, %v572
      %v791 = vsel %vm771, %v781, %v601
      %v792 = vsel %vm772, %v782, %v630
      %v793 = vsel %vm773, %v783, %v659
      %v794 = vsel %vm774, %v784, %v688
      %v795 = vsel %vm775, %v785, %v717
      %v796 = vsel %vm776, %v786, %v746
      %vm797 = vcmp.lt.s32.totalorder %v787, 8
      %vm798 = vcmp.lt.s32.totalorder %v788, 8
      %vm799 = vcmp.lt.s32.totalorder %v789, 8
      %vm800 = vcmp.lt.s32.totalorder %v790, 8
      %vm801 = vcmp.lt.s32.totalorder %v791, 8
      %vm802 = vcmp.lt.s32.totalorder %v792, 8
      %vm803 = vcmp.lt.s32.totalorder %v793, 8
      %vm804 = vcmp.lt.s32.totalorder %v794, 8
      %vm805 = vcmp.lt.s32.totalorder %v795, 8
      %vm806 = vcmp.lt.s32.totalorder %v796, 8
      %vm807 = vcmp.lt.s32.totalorder %v447, 80
      %vm808 = vcmp.lt.s32.totalorder %v448, 80
      %vm809 = vcmp.lt.s32.totalorder %v449, 80
      %vm810 = vcmp.lt.s32.totalorder %v450, 80
      %vm811 = vcmp.lt.s32.totalorder %v451, 80
      %vm812 = vcmp.lt.s32.totalorder %v452, 80
      %vm813 = vcmp.lt.s32.totalorder %v453, 80
      %vm814 = vcmp.lt.s32.totalorder %v454, 80
      %vm815 = vcmp.lt.s32.totalorder %v455, 80
      %vm816 = vcmp.lt.s32.totalorder %v456, 80
      %vm817 = vmand %vm797, %vm807
      %vm818 = vmand %vm798, %vm808
      %vm819 = vmand %vm799, %vm809
      %vm820 = vmand %vm800, %vm810
      %vm821 = vmand %vm801, %vm811
      %vm822 = vmand %vm802, %vm812
      %vm823 = vmand %vm803, %vm813
      %vm824 = vmand %vm804, %vm814
      %vm825 = vmand %vm805, %vm815
      %vm826 = vmand %vm806, %vm816
      %v827 = vsel %vm817, %v436, 0.0
      %v828 = vsel %vm818, %v437, 0.0
      %v829 = vsel %vm819, %v438, 0.0
      %v830 = vsel %vm820, %v439, 0.0
      %v831 = vsel %vm821, %v440, 0.0
      %v832 = vsel %vm822, %v441, 0.0
      %v833 = vsel %vm823, %v442, 0.0
      %v834 = vsel %vm824, %v443, 0.0
      %v835 = vsel %vm825, %v444, 0.0
      %v836 = vsel %vm826, %v445, 0.0
      %v837 = vpack.c.bf16 %v827, %v827
      %v838 = vpack.c.bf16 %v828, %v828
      %v839 = vpack.c.bf16 %v829, %v829
      %v840 = vpack.c.bf16 %v830, %v830
      %v841 = vpack.c.bf16 %v831, %v831
      %v842 = vpack.c.bf16 %v832, %v832
      %v843 = vpack.c.bf16 %v833, %v833
      %v844 = vpack.c.bf16 %v834, %v834
      %v845 = vpack.c.bf16 %v835, %v835
      %v846 = vpack.c.bf16 %v836, %v836
      %vm847 = vsmask.f32 5392
      %vm848 = vmor %vm282, %vm847
      %v850 = vshrl.u32 %v837, 16
      %v852 = vrot.slane %v850, 6
      %v853 = vshll.u32 %v837, 16
      %v855 = vrot.slane %v853, 7
      %v856 = vor.u32 %v852, %v855
      %v857 = vrot.slane %v856, 4
      %v859 = vshrl.u32 %v838, 16
      %v861 = vrot.slane %v859, 6
      %v862 = vshll.u32 %v838, 16
      %v864 = vrot.slane %v862, 7
      %v865 = vor.u32 %v861, %v864
      %v866 = vsel %vm848, %v857, %v865
      %v867 = vrot.slane %v865, 4
      %v869 = vshrl.u32 %v839, 16
      %v871 = vrot.slane %v869, 6
      %v872 = vshll.u32 %v839, 16
      %v874 = vrot.slane %v872, 7
      %v875 = vor.u32 %v871, %v874
      %v876 = vsel %vm848, %v867, %v875
      %v877 = vrot.slane %v875, 4
      %v879 = vshrl.u32 %v840, 16
      %v881 = vrot.slane %v879, 6
      %v882 = vshll.u32 %v840, 16
      %v884 = vrot.slane %v882, 7
      %v885 = vor.u32 %v881, %v884
      %v886 = vsel %vm848, %v877, %v885
      %v887 = vrot.slane %v885, 4
      %v889 = vshrl.u32 %v841, 16
      %v891 = vrot.slane %v889, 6
      %v892 = vshll.u32 %v841, 16
      %v894 = vrot.slane %v892, 7
      %v895 = vor.u32 %v891, %v894
      %v896 = vsel %vm848, %v887, %v895
      %v897 = vrot.slane %v895, 4
      %v899 = vshrl.u32 %v842, 16
      %v901 = vrot.slane %v899, 6
      %v902 = vshll.u32 %v842, 16
      %v904 = vrot.slane %v902, 7
      %v905 = vor.u32 %v901, %v904
      %v906 = vsel %vm848, %v897, %v905
      %v907 = vrot.slane %v905, 4
      %v909 = vshrl.u32 %v843, 16
      %v911 = vrot.slane %v909, 6
      %v912 = vshll.u32 %v843, 16
      %v914 = vrot.slane %v912, 7
      %v915 = vor.u32 %v911, %v914
      %v916 = vsel %vm848, %v907, %v915
      %v917 = vrot.slane %v915, 4
      %v919 = vshrl.u32 %v844, 16
      %v921 = vrot.slane %v919, 6
      %v922 = vshll.u32 %v844, 16
      %v924 = vrot.slane %v922, 7
      %v925 = vor.u32 %v921, %v924
      %v926 = vsel %vm848, %v917, %v925
      %v927 = vrot.slane %v925, 4
      %v929 = vshrl.u32 %v845, 16
      %v931 = vrot.slane %v929, 6
      %v932 = vshll.u32 %v845, 16
      %v934 = vrot.slane %v932, 7
      %v935 = vor.u32 %v931, %v934
      %v936 = vsel %vm848, %v927, %v935
      %v937 = vrot.slane %v935, 4
      %v939 = vshrl.u32 %v846, 16
      %v941 = vrot.slane %v939, 6
      %v942 = vshll.u32 %v846, 16
      %v944 = vrot.slane %v942, 7
      %v945 = vor.u32 %v941, %v944
      %v946 = vsel %vm848, %v937, %v945
      %v947 = vrot.slane %v945, 4
      %v959 = vld [vmem:[#allocation2 + $0x4] sm:$0xe]
      %v960 = vsel %vm289, %v856, %v959
      %961 = vst [vmem:[#allocation2 + $0x4] sm:$0xe] %v960
      %962 = vst [vmem:[#allocation2 + $0x8] sm:$0xf] %v866
      %963 = vst [vmem:[#allocation2 + $0xc] sm:$0xf] %v876
      %964 = vst [vmem:[#allocation2 + $0x10] sm:$0xf] %v886
      %965 = vst [vmem:[#allocation2 + $0x14] sm:$0xf] %v896
      %966 = vst [vmem:[#allocation2 + $0x18] sm:$0xf] %v906
      %967 = vst [vmem:[#allocation2 + $0x1c] sm:$0xf] %v916
      %968 = vst [vmem:[#allocation2 + $0x20] sm:$0xf] %v926
      %969 = vst [vmem:[#allocation2 + $0x24] sm:$0xf] %v936
      %970 = vst [vmem:[#allocation2 + $0x28] sm:$0xf] %v946
      %v971 = vld [vmem:[#allocation2 + $0x2c] sm:$0x3]
      %v972 = vsel %vm283, %v947, %v971
      %973 = vst [vmem:[#allocation2 + $0x2c] sm:$0x3] %v972
      %v974 = vld [vmem:[%s273] sm:$0xf]
      %v975 = vld [vmem:[%s273 + $0x4] sm:$0xf]
      %v976 = vld [vmem:[%s273 + $0x8] sm:$0xf]
      %v977 = vld [vmem:[%s273 + $0xc] sm:$0xf]
      %v978 = vld [vmem:[%s273 + $0x10] sm:$0xf]
      %v979 = vld [vmem:[%s273 + $0x14] sm:$0xf]
      %v980 = vld [vmem:[%s273 + $0x18] sm:$0xf]
      %v981 = vld [vmem:[%s273 + $0x1c] sm:$0xf]
      %v982 = vld [vmem:[%s273 + $0x20] sm:$0xf]
      %v983 = vld [vmem:[%s273 + $0x24] sm:$0xf]
      %v984 = vld [vmem:[%s5] sm:$0xf]
      %v985 = vld [vmem:[%s5 + $0x4] sm:$0xf]
      %v986 = vld [vmem:[%s5 + $0x8] sm:$0xf]
      %v987 = vld [vmem:[%s5 + $0xc] sm:$0xf]
      %v988 = vld [vmem:[%s5 + $0x10] sm:$0xf]
      %v989 = vld [vmem:[%s5 + $0x14] sm:$0xf]
      %v990 = vld [vmem:[%s5 + $0x18] sm:$0xf]
      %v991 = vld [vmem:[%s5 + $0x1c] sm:$0xf]
      %v992 = vld [vmem:[%s5 + $0x20] sm:$0xf]
      %v993 = vld [vmem:[%s5 + $0x24] sm:$0xf]
      %v994 = vld [vmem:[%s5 + $0x28] sm:$0xf]
      %v995 = vld [vmem:[%s5 + $0x2c] sm:$0xf]
      %v996 = vld [vmem:[%s5 + $0x30] sm:$0xf]
      %v997 = vld [vmem:[%s5 + $0x34] sm:$0xf]
      %v998 = vld [vmem:[%s5 + $0x38] sm:$0xf]
      %v999 = vld [vmem:[%s5 + $0x3c] sm:$0xf]
      %v1000 = vld [vmem:[#allocation2] sm:$0xf]
      %v1001 = vld [vmem:[#allocation2 + $0x4] sm:$0xf]
      %v1002 = vld [vmem:[#allocation2 + $0x8] sm:$0xf]
      %v1003 = vld [vmem:[#allocation2 + $0xc] sm:$0xf]
      %v1004 = vld [vmem:[#allocation2 + $0x10] sm:$0xf]
      %v1005 = vld [vmem:[#allocation2 + $0x14] sm:$0xf]
      %v1006 = vld [vmem:[#allocation2 + $0x18] sm:$0xf]
      %v1007 = vld [vmem:[#allocation2 + $0x1c] sm:$0xf]
      %v1008 = vld [vmem:[#allocation2 + $0x20] sm:$0xf]
      %v1009 = vld [vmem:[#allocation2 + $0x24] sm:$0xf]
      %v1010 = vld [vmem:[%s3] sm:$0xf]
      %v1011 = vld [vmem:[%s3 + $0x4] sm:$0xf]
      %v1012 = vld [vmem:[%s3 + $0x8] sm:$0xf]
      %v1013 = vld [vmem:[%s3 + $0xc] sm:$0xf]
      %v1014 = vld [vmem:[%s3 + $0x10] sm:$0xf]
      %v1015 = vld [vmem:[%s3 + $0x14] sm:$0xf]
      %v1016 = vld [vmem:[%s3 + $0x18] sm:$0xf]
      %v1017 = vld [vmem:[%s3 + $0x1c] sm:$0xf]
      %v1018 = vld [vmem:[%s3 + $0x20] sm:$0xf]
      %v1019 = vld [vmem:[%s3 + $0x24] sm:$0xf]
      %v1020 = vld [vmem:[%s3 + $0x28] sm:$0xf]
      %v1021 = vld [vmem:[%s3 + $0x2c] sm:$0xf]
      %v1022 = vld [vmem:[%s3 + $0x30] sm:$0xf]
      %v1023 = vld [vmem:[%s3 + $0x34] sm:$0xf]
      %v1024 = vld [vmem:[%s3 + $0x38] sm:$0xf]
      %v1025 = vld [vmem:[%s3 + $0x3c] sm:$0xf]
      %v1036 = vunpack.c.l.b16 %v1000
      %v1037 = vunpack.c.l.b16 %v1001
      %v1038 = vunpack.c.l.b16 %v1002
      %v1039 = vunpack.c.l.b16 %v1003
      %v1040 = vunpack.c.l.b16 %v1004
      %v1041 = vunpack.c.l.b16 %v1005
      %v1042 = vunpack.c.l.b16 %v1006
      %v1043 = vunpack.c.l.b16 %v1007
      %v1044 = vunpack.c.l.b16 %v1008
      %v1045 = vunpack.c.l.b16 %v1009
      %v1046 = vpack.c.b16 %v1037, %v1036
      %v1047 = vpack.c.b16 %v1039, %v1038
      %v1048 = vpack.c.b16 %v1041, %v1040
      %v1049 = vpack.c.b16 %v1043, %v1042
      %v1050 = vpack.c.b16 %v1045, %v1044
      %v1072 = vunpack.c.l.b16 %v1010
      %v1073 = vunpack.c.l.b16 %v1011
      %v1074 = vunpack.c.l.b16 %v1012
      %v1075 = vunpack.c.l.b16 %v1013
      %v1076 = vunpack.c.l.b16 %v1014
      %v1077 = vunpack.c.l.b16 %v1015
      %v1078 = vunpack.c.l.b16 %v1016
      %v1079 = vunpack.c.l.b16 %v1017
      %v1080 = vunpack.c.l.b16 %v1018
      %v1081 = vunpack.c.l.b16 %v1019
      %v1082 = vunpack.c.l.b16 %v1020
      %v1083 = vunpack.c.l.b16 %v1021
      %v1084 = vunpack.c.l.b16 %v1022
      %v1085 = vunpack.c.l.b16 %v1023
      %v1086 = vunpack.c.l.b16 %v1024
      %v1087 = vunpack.c.l.b16 %v1025
      %v1088 = vpack.c.b16 %v1073, %v1072
      %v1089 = vpack.c.b16 %v1075, %v1074
      %v1090 = vpack.c.b16 %v1077, %v1076
      %v1091 = vpack.c.b16 %v1079, %v1078
      %v1092 = vpack.c.b16 %v1081, %v1080
      %v1093 = vpack.c.b16 %v1083, %v1082
      %v1094 = vpack.c.b16 %v1085, %v1084
      %v1095 = vpack.c.b16 %v1087, %v1086
      %1104 = vmatpush.bf16.msra.mxu0 %v1095
      %1105 = vmatpush.bf16.msra.mxu0 %v1094
      %1106 = vmatpush.bf16.msra.mxu0 %v1093
      %1107 = vmatpush.bf16.msra.mxu0 %v1092
      %1108 = vmatpush.bf16.msra.mxu0 %v1091
      %1109 = vmatpush.bf16.msra.mxu0 %v1090
      %1110 = vmatpush.bf16.msra.mxu0 %v1089
      %1111 = vmatpush.bf16.msra.mxu0 %v1088
      %1112 = vmatmul.bf16.gmra.mxu0 %v1046
      %v1113 = vpop.f32.mrf.mxu0
      %v1114 = vadd.f32 0.0, %v1113
      %v1115 = vpop.f32.mrf.mxu0
      %v1116 = vadd.f32 0.0, %v1115
      %1117 = vmatmul.bf16.gmra.mxu0 %v1047
      %v1118 = vpop.f32.mrf.mxu0
      %v1119 = vadd.f32 0.0, %v1118
      %v1120 = vpop.f32.mrf.mxu0
      %v1121 = vadd.f32 0.0, %v1120
      %1122 = vmatmul.bf16.gmra.mxu0 %v1048
      %v1123 = vpop.f32.mrf.mxu0
      %v1124 = vadd.f32 0.0, %v1123
      %v1125 = vpop.f32.mrf.mxu0
      %v1126 = vadd.f32 0.0, %v1125
      %1127 = vmatmul.bf16.gmra.mxu0 %v1049
      %v1128 = vpop.f32.mrf.mxu0
      %v1129 = vadd.f32 0.0, %v1128
      %v1130 = vpop.f32.mrf.mxu0
      %v1131 = vadd.f32 0.0, %v1130
      %1132 = vmatmul.bf16.gmra.mxu0 %v1050
      %v1133 = vpop.f32.mrf.mxu0
      %v1134 = vadd.f32 0.0, %v1133
      %v1135 = vpop.f32.mrf.mxu0
      %v1136 = vadd.f32 0.0, %v1135
      %1137 = vdwg.mxu0
      %v1148 = vunpack.c.l.b16 %v974
      %v1149 = vunpack.c.l.b16 %v975
      %v1150 = vunpack.c.l.b16 %v976
      %v1151 = vunpack.c.l.b16 %v977
      %v1152 = vunpack.c.l.b16 %v978
      %v1153 = vunpack.c.l.b16 %v979
      %v1154 = vunpack.c.l.b16 %v980
      %v1155 = vunpack.c.l.b16 %v981
      %v1156 = vunpack.c.l.b16 %v982
      %v1157 = vunpack.c.l.b16 %v983
      %v1158 = vpack.c.b16 %v1149, %v1148
      %v1159 = vpack.c.b16 %v1151, %v1150
      %v1160 = vpack.c.b16 %v1153, %v1152
      %v1161 = vpack.c.b16 %v1155, %v1154
      %v1162 = vpack.c.b16 %v1157, %v1156
      %v1184 = vunpack.c.l.b16 %v984
      %v1185 = vunpack.c.l.b16 %v985
      %v1186 = vunpack.c.l.b16 %v986
      %v1187 = vunpack.c.l.b16 %v987
      %v1188 = vunpack.c.l.b16 %v988
      %v1189 = vunpack.c.l.b16 %v989
      %v1190 = vunpack.c.l.b16 %v990
      %v1191 = vunpack.c.l.b16 %v991
      %v1192 = vunpack.c.l.b16 %v992
      %v1193 = vunpack.c.l.b16 %v993
      %v1194 = vunpack.c.l.b16 %v994
      %v1195 = vunpack.c.l.b16 %v995
      %v1196 = vunpack.c.l.b16 %v996
      %v1197 = vunpack.c.l.b16 %v997
      %v1198 = vunpack.c.l.b16 %v998
      %v1199 = vunpack.c.l.b16 %v999
      %v1200 = vpack.c.b16 %v1185, %v1184
      %v1201 = vpack.c.b16 %v1187, %v1186
      %v1202 = vpack.c.b16 %v1189, %v1188
      %v1203 = vpack.c.b16 %v1191, %v1190
      %v1204 = vpack.c.b16 %v1193, %v1192
      %v1205 = vpack.c.b16 %v1195, %v1194
      %v1206 = vpack.c.b16 %v1197, %v1196
      %v1207 = vpack.c.b16 %v1199, %v1198
      %1216 = vmatpush.bf16.msra.mxu0 %v1207
      %1217 = vmatpush.bf16.msra.mxu0 %v1206
      %1218 = vmatpush.bf16.msra.mxu0 %v1205
      %1219 = vmatpush.bf16.msra.mxu0 %v1204
      %1220 = vmatpush.bf16.msra.mxu0 %v1203
      %1221 = vmatpush.bf16.msra.mxu0 %v1202
      %1222 = vmatpush.bf16.msra.mxu0 %v1201
      %1223 = vmatpush.bf16.msra.mxu0 %v1200
      %1224 = vmatmul.bf16.gmra.mxu0 %v1158
      %v1225 = vpop.f32.mrf.mxu0
      %v1226 = vadd.f32 %v1114, %v1225
      %v1227 = vpop.f32.mrf.mxu0
      %v1228 = vadd.f32 %v1116, %v1227
      %1229 = vmatmul.bf16.gmra.mxu0 %v1159
      %v1230 = vpop.f32.mrf.mxu0
      %v1231 = vadd.f32 %v1119, %v1230
      %v1232 = vpop.f32.mrf.mxu0
      %v1233 = vadd.f32 %v1121, %v1232
      %1234 = vmatmul.bf16.gmra.mxu0 %v1160
      %v1235 = vpop.f32.mrf.mxu0
      %v1236 = vadd.f32 %v1124, %v1235
      %v1237 = vpop.f32.mrf.mxu0
      %v1238 = vadd.f32 %v1126, %v1237
      %1239 = vmatmul.bf16.gmra.mxu0 %v1161
      %v1240 = vpop.f32.mrf.mxu0
      %v1241 = vadd.f32 %v1129, %v1240
      %v1242 = vpop.f32.mrf.mxu0
      %v1243 = vadd.f32 %v1131, %v1242
      %1244 = vmatmul.bf16.gmra.mxu0 %v1162
      %v1245 = vpop.f32.mrf.mxu0
      %v1246 = vadd.f32 %v1134, %v1245
      %v1247 = vpop.f32.mrf.mxu0
      %v1248 = vadd.f32 %v1136, %v1247
      %1249 = vdwg.mxu0
      %v1250 = vld [vmem:[#allocation2] sm:$0xf]
      %v1251 = vld [vmem:[#allocation2 + $0x4] sm:$0xf]
      %v1252 = vld [vmem:[#allocation2 + $0x8] sm:$0xf]
      %v1253 = vld [vmem:[#allocation2 + $0xc] sm:$0xf]
      %v1254 = vld [vmem:[#allocation2 + $0x10] sm:$0xf]
      %v1255 = vld [vmem:[#allocation2 + $0x14] sm:$0xf]
      %v1256 = vld [vmem:[#allocation2 + $0x18] sm:$0xf]
      %v1257 = vld [vmem:[#allocation2 + $0x1c] sm:$0xf]
      %v1258 = vld [vmem:[#allocation2 + $0x20] sm:$0xf]
      %v1259 = vld [vmem:[#allocation2 + $0x24] sm:$0xf]
      %v1260 = vld [vmem:[#allocation2 + $0x28] sm:$0x1]
      %v1261 = vld [vmem:[%s3 + $0x40] sm:$0xf]
      %v1262 = vld [vmem:[%s3 + $0x44] sm:$0xf]
      %v1263 = vld [vmem:[%s3 + $0x48] sm:$0xf]
      %v1264 = vld [vmem:[%s3 + $0x4c] sm:$0xf]
      %v1265 = vld [vmem:[%s3 + $0x50] sm:$0xf]
      %v1266 = vld [vmem:[%s3 + $0x54] sm:$0xf]
      %v1267 = vld [vmem:[%s3 + $0x58] sm:$0xf]
      %v1268 = vld [vmem:[%s3 + $0x5c] sm:$0xf]
      %v1269 = vld [vmem:[%s3 + $0x60] sm:$0xf]
      %v1270 = vld [vmem:[%s3 + $0x64] sm:$0xf]
      %v1271 = vld [vmem:[%s3 + $0x68] sm:$0xf]
      %v1272 = vld [vmem:[%s3 + $0x6c] sm:$0xf]
      %v1273 = vld [vmem:[%s3 + $0x70] sm:$0xf]
      %v1274 = vld [vmem:[%s3 + $0x74] sm:$0xf]
      %v1275 = vld [vmem:[%s3 + $0x78] sm:$0xf]
      %v1276 = vld [vmem:[%s3 + $0x7c] sm:$0xf]
      %v1288 = vunpack.c.l.b16 %v1250
      %v1289 = vunpack.c.l.b16 %v1251
      %v1290 = vunpack.c.l.b16 %v1252
      %v1291 = vunpack.c.l.b16 %v1253
      %v1292 = vunpack.c.l.b16 %v1254
      %v1293 = vunpack.c.l.b16 %v1255
      %v1294 = vunpack.c.l.b16 %v1256
      %v1295 = vunpack.c.l.b16 %v1257
      %v1296 = vunpack.c.l.b16 %v1258
      %v1297 = vunpack.c.l.b16 %v1259
      %v1298 = vunpack.c.l.b16 %v1260
      %v1299 = vpack.c.b16 %v1289, %v1288
      %v1300 = vpack.c.b16 %v1291, %v1290
      %v1301 = vpack.c.b16 %v1293, %v1292
      %v1302 = vpack.c.b16 %v1295, %v1294
      %v1303 = vpack.c.b16 %v1297, %v1296
      %v1304 = vpack.c.b16 %v1298, %v1298
      %vm1305 = vsmask.f32 7424
      %v1307 = vshrl.u32 %v1299, 16
      %v1309 = vshll.u32 %v1299, 16
      %v1311 = vrot.slane %v1309, 1
      %v1312 = vor.u32 %v1307, %v1311
      %v1314 = vshll.u32 %v1300, 16
      %v1316 = vrot.slane %v1314, 1
      %v1317 = vsel %vm1305, %v1312, %v1316
      %v1318 = vshrl.u32 %v1300, 16
      %v1320 = vor.u32 %v1318, %v1316
      %v1322 = vshll.u32 %v1301, 16
      %v1324 = vrot.slane %v1322, 1
      %v1325 = vsel %vm1305, %v1320, %v1324
      %v1326 = vshrl.u32 %v1301, 16
      %v1328 = vor.u32 %v1326, %v1324
      %v1330 = vshll.u32 %v1302, 16
      %v1332 = vrot.slane %v1330, 1
      %v1333 = vsel %vm1305, %v1328, %v1332
      %v1334 = vshrl.u32 %v1302, 16
      %v1336 = vor.u32 %v1334, %v1332
      %v1338 = vshll.u32 %v1303, 16
      %v1340 = vrot.slane %v1338, 1
      %v1341 = vsel %vm1305, %v1336, %v1340
      %v1342 = vshrl.u32 %v1303, 16
      %v1344 = vor.u32 %v1342, %v1340
      %v1346 = vshll.u32 %v1304, 16
      %v1348 = vrot.slane %v1346, 1
      %v1349 = vsel %vm1305, %v1344, %v1348
      %v1371 = vunpack.c.l.b16 %v1261
      %v1372 = vunpack.c.l.b16 %v1262
      %v1373 = vunpack.c.l.b16 %v1263
      %v1374 = vunpack.c.l.b16 %v1264
      %v1375 = vunpack.c.l.b16 %v1265
      %v1376 = vunpack.c.l.b16 %v1266
      %v1377 = vunpack.c.l.b16 %v1267
      %v1378 = vunpack.c.l.b16 %v1268
      %v1379 = vunpack.c.l.b16 %v1269
      %v1380 = vunpack.c.l.b16 %v1270
      %v1381 = vunpack.c.l.b16 %v1271
      %v1382 = vunpack.c.l.b16 %v1272
      %v1383 = vunpack.c.l.b16 %v1273
      %v1384 = vunpack.c.l.b16 %v1274
      %v1385 = vunpack.c.l.b16 %v1275
      %v1386 = vunpack.c.l.b16 %v1276
      %v1387 = vpack.c.b16 %v1372, %v1371
      %v1388 = vpack.c.b16 %v1374, %v1373
      %v1389 = vpack.c.b16 %v1376, %v1375
      %v1390 = vpack.c.b16 %v1378, %v1377
      %v1391 = vpack.c.b16 %v1380, %v1379
      %v1392 = vpack.c.b16 %v1382, %v1381
      %v1393 = vpack.c.b16 %v1384, %v1383
      %v1394 = vpack.c.b16 %v1386, %v1385
      %1403 = vmatpush.bf16.msra.mxu0 %v1394
      %1404 = vmatpush.bf16.msra.mxu0 %v1393
      %1405 = vmatpush.bf16.msra.mxu0 %v1392
      %1406 = vmatpush.bf16.msra.mxu0 %v1391
      %1407 = vmatpush.bf16.msra.mxu0 %v1390
      %1408 = vmatpush.bf16.msra.mxu0 %v1389
      %1409 = vmatpush.bf16.msra.mxu0 %v1388
      %1410 = vmatpush.bf16.msra.mxu0 %v1387
      %1411 = vmatmul.bf16.gmra.mxu0 %v1317
      %v1412 = vpop.f32.mrf.mxu0
      %v1413 = vadd.f32 0.0, %v1412
      %v1414 = vpop.f32.mrf.mxu0
      %v1415 = vadd.f32 0.0, %v1414
      %1416 = vmatmul.bf16.gmra.mxu0 %v1325
      %v1417 = vpop.f32.mrf.mxu0
      %v1418 = vadd.f32 0.0, %v1417
      %v1419 = vpop.f32.mrf.mxu0
      %v1420 = vadd.f32 0.0, %v1419
      %1421 = vmatmul.bf16.gmra.mxu0 %v1333
      %v1422 = vpop.f32.mrf.mxu0
      %v1423 = vadd.f32 0.0, %v1422
      %v1424 = vpop.f32.mrf.mxu0
      %v1425 = vadd.f32 0.0, %v1424
      %1426 = vmatmul.bf16.gmra.mxu0 %v1341
      %v1427 = vpop.f32.mrf.mxu0
      %v1428 = vadd.f32 0.0, %v1427
      %v1429 = vpop.f32.mrf.mxu0
      %v1430 = vadd.f32 0.0, %v1429
      %1431 = vmatmul.bf16.gmra.mxu0 %v1349
      %v1432 = vpop.f32.mrf.mxu0
      %v1433 = vadd.f32 0.0, %v1432
      %v1434 = vpop.f32.mrf.mxu0
      %v1435 = vadd.f32 0.0, %v1434
      %1436 = vdwg.mxu0
      %v1437 = vadd.f32 %v1226, %v1413
      %v1438 = vadd.f32 %v1228, %v1415
      %v1439 = vadd.f32 %v1231, %v1418
      %v1440 = vadd.f32 %v1233, %v1420
      %v1441 = vadd.f32 %v1236, %v1423
      %v1442 = vadd.f32 %v1238, %v1425
      %v1443 = vadd.f32 %v1241, %v1428
      %v1444 = vadd.f32 %v1243, %v1430
      %v1445 = vadd.f32 %v1246, %v1433
      %v1446 = vadd.f32 %v1248, %v1435
      %v1447 = vld [vmem:[#allocation2] sm:$0xe]
      %v1448 = vld [vmem:[%s3 + $0x80] sm:$0xf]
      %v1449 = vld [vmem:[%s3 + $0x84] sm:$0xf]
      %v1450 = vld [vmem:[%s3 + $0x88] sm:$0xf]
      %v1451 = vld [vmem:[%s3 + $0x8c] sm:$0xf]
      %v1452 = vld [vmem:[%s3 + $0x90] sm:$0xf]
      %v1453 = vld [vmem:[%s3 + $0x94] sm:$0xf]
      %v1454 = vld [vmem:[%s3 + $0x98] sm:$0xf]
      %v1455 = vld [vmem:[%s3 + $0x9c] sm:$0xf]
      %v1456 = vld [vmem:[%s3 + $0xa0] sm:$0xf]
      %v1457 = vld [vmem:[%s3 + $0xa4] sm:$0xf]
      %v1458 = vld [vmem:[%s3 + $0xa8] sm:$0xf]
      %v1459 = vld [vmem:[%s3 + $0xac] sm:$0xf]
      %v1460 = vld [vmem:[%s3 + $0xb0] sm:$0xf]
      %v1461 = vld [vmem:[%s3 + $0xb4] sm:$0xf]
      %v1462 = vld [vmem:[%s3 + $0xb8] sm:$0xf]
      %v1463 = vld [vmem:[%s3 + $0xbc] sm:$0xf]
      %v1465 = vunpack.c.l.b16 %v1447
      %v1466 = vpack.c.b16 %v1289, %v1465
      %vm1467 = vcmask 1046528
      %v1468 = vrot.slane %v1466, 1
      %v1469 = vrot.slane %v1300, 1
      %v1470 = vsel %vm1467, %v1468, %v1469
      %v1471 = vrot.slane %v1301, 1
      %v1472 = vsel %vm1467, %v1469, %v1471
      %v1473 = vrot.slane %v1302, 1
      %v1474 = vsel %vm1467, %v1471, %v1473
      %v1475 = vrot.slane %v1303, 1
      %v1476 = vsel %vm1467, %v1473, %v1475
      %v1477 = vrot.slane %v1304, 1
      %v1478 = vsel %vm1467, %v1475, %v1477
      %v1500 = vunpack.c.l.b16 %v1448
      %v1501 = vunpack.c.l.b16 %v1449
      %v1502 = vunpack.c.l.b16 %v1450
      %v1503 = vunpack.c.l.b16 %v1451
      %v1504 = vunpack.c.l.b16 %v1452
      %v1505 = vunpack.c.l.b16 %v1453
      %v1506 = vunpack.c.l.b16 %v1454
      %v1507 = vunpack.c.l.b16 %v1455
      %v1508 = vunpack.c.l.b16 %v1456
      %v1509 = vunpack.c.l.b16 %v1457
      %v1510 = vunpack.c.l.b16 %v1458
      %v1511 = vunpack.c.l.b16 %v1459
      %v1512 = vunpack.c.l.b16 %v1460
      %v1513 = vunpack.c.l.b16 %v1461
      %v1514 = vunpack.c.l.b16 %v1462
      %v1515 = vunpack.c.l.b16 %v1463
      %v1516 = vpack.c.b16 %v1501, %v1500
      %v1517 = vpack.c.b16 %v1503, %v1502
      %v1518 = vpack.c.b16 %v1505, %v1504
      %v1519 = vpack.c.b16 %v1507, %v1506
      %v1520 = vpack.c.b16 %v1509, %v1508
      %v1521 = vpack.c.b16 %v1511, %v1510
      %v1522 = vpack.c.b16 %v1513, %v1512
      %v1523 = vpack.c.b16 %v1515, %v1514
      %1532 = vmatpush.bf16.msra.mxu0 %v1523
      %1533 = vmatpush.bf16.msra.mxu0 %v1522
      %1534 = vmatpush.bf16.msra.mxu0 %v1521
      %1535 = vmatpush.bf16.msra.mxu0 %v1520
      %1536 = vmatpush.bf16.msra.mxu0 %v1519
      %1537 = vmatpush.bf16.msra.mxu0 %v1518
      %1538 = vmatpush.bf16.msra.mxu0 %v1517
      %1539 = vmatpush.bf16.msra.mxu0 %v1516
      %1540 = vmatmul.bf16.gmra.mxu0 %v1470
      %v1541 = vpop.f32.mrf.mxu0
      %v1542 = vadd.f32 0.0, %v1541
      %v1543 = vpop.f32.mrf.mxu0
      %v1544 = vadd.f32 0.0, %v1543
      %1545 = vmatmul.bf16.gmra.mxu0 %v1472
      %v1546 = vpop.f32.mrf.mxu0
      %v1547 = vadd.f32 0.0, %v1546
      %v1548 = vpop.f32.mrf.mxu0
      %v1549 = vadd.f32 0.0, %v1548
      %1550 = vmatmul.bf16.gmra.mxu0 %v1474
      %v1551 = vpop.f32.mrf.mxu0
      %v1552 = vadd.f32 0.0, %v1551
      %v1553 = vpop.f32.mrf.mxu0
      %v1554 = vadd.f32 0.0, %v1553
      %1555 = vmatmul.bf16.gmra.mxu0 %v1476
      %v1556 = vpop.f32.mrf.mxu0
      %v1557 = vadd.f32 0.0, %v1556
      %v1558 = vpop.f32.mrf.mxu0
      %v1559 = vadd.f32 0.0, %v1558
      %1560 = vmatmul.bf16.gmra.mxu0 %v1478
      %v1561 = vpop.f32.mrf.mxu0
      %v1562 = vadd.f32 0.0, %v1561
      %v1563 = vpop.f32.mrf.mxu0
      %v1564 = vadd.f32 0.0, %v1563
      %1565 = vdwg.mxu0
      %v1566 = vadd.f32 %v1437, %v1542
      %v1567 = vadd.f32 %v1438, %v1544
      %v1568 = vadd.f32 %v1439, %v1547
      %v1569 = vadd.f32 %v1440, %v1549
      %v1570 = vadd.f32 %v1441, %v1552
      %v1571 = vadd.f32 %v1442, %v1554
      %v1572 = vadd.f32 %v1443, %v1557
      %v1573 = vadd.f32 %v1444, %v1559
      %v1574 = vadd.f32 %v1445, %v1562
      %v1575 = vadd.f32 %v1446, %v1564
      %v1576 = vld [vmem:[#allocation2 + $0x4] sm:$0xe]
      %v1577 = vld [vmem:[#allocation2 + $0x8] sm:$0xf]
      %v1578 = vld [vmem:[#allocation2 + $0xc] sm:$0xf]
      %v1579 = vld [vmem:[#allocation2 + $0x10] sm:$0xf]
      %v1580 = vld [vmem:[#allocation2 + $0x14] sm:$0xf]
      %v1581 = vld [vmem:[#allocation2 + $0x18] sm:$0xf]
      %v1582 = vld [vmem:[#allocation2 + $0x1c] sm:$0xf]
      %v1583 = vld [vmem:[#allocation2 + $0x20] sm:$0xf]
      %v1584 = vld [vmem:[#allocation2 + $0x24] sm:$0xf]
      %v1585 = vld [vmem:[#allocation2 + $0x28] sm:$0xf]
      %v1586 = vld [vmem:[#allocation2 + $0x2c] sm:$0x1]
      %v1587 = vld [vmem:[%s3 + $0xc0] sm:$0xf]
      %v1588 = vld [vmem:[%s3 + $0xc4] sm:$0xf]
      %v1589 = vld [vmem:[%s3 + $0xc8] sm:$0xf]
      %v1590 = vld [vmem:[%s3 + $0xcc] sm:$0xf]
      %v1591 = vld [vmem:[%s3 + $0xd0] sm:$0xf]
      %v1592 = vld [vmem:[%s3 + $0xd4] sm:$0xf]
      %v1593 = vld [vmem:[%s3 + $0xd8] sm:$0xf]
      %v1594 = vld [vmem:[%s3 + $0xdc] sm:$0xf]
      %v1595 = vld [vmem:[%s3 + $0xe0] sm:$0xf]
      %v1596 = vld [vmem:[%s3 + $0xe4] sm:$0xf]
      %v1597 = vld [vmem:[%s3 + $0xe8] sm:$0xf]
      %v1598 = vld [vmem:[%s3 + $0xec] sm:$0xf]
      %v1599 = vld [vmem:[%s3 + $0xf0] sm:$0xf]
      %v1600 = vld [vmem:[%s3 + $0xf4] sm:$0xf]
      %v1601 = vld [vmem:[%s3 + $0xf8] sm:$0xf]
      %v1602 = vld [vmem:[%s3 + $0xfc] sm:$0xf]
      %v1614 = vunpack.c.l.b16 %v1576
      %v1615 = vunpack.c.l.b16 %v1577
      %v1616 = vunpack.c.l.b16 %v1578
      %v1617 = vunpack.c.l.b16 %v1579
      %v1618 = vunpack.c.l.b16 %v1580
      %v1619 = vunpack.c.l.b16 %v1581
      %v1620 = vunpack.c.l.b16 %v1582
      %v1621 = vunpack.c.l.b16 %v1583
      %v1622 = vunpack.c.l.b16 %v1584
      %v1623 = vunpack.c.l.b16 %v1585
      %v1624 = vunpack.c.l.b16 %v1586
      %v1625 = vpack.c.b16 %v1615, %v1614
      %v1626 = vpack.c.b16 %v1617, %v1616
      %v1627 = vpack.c.b16 %v1619, %v1618
      %v1628 = vpack.c.b16 %v1621, %v1620
      %v1629 = vpack.c.b16 %v1623, %v1622
      %v1630 = vpack.c.b16 %v1624, %v1624
      %v1631 = vrot.slane %v1625, 1
      %v1632 = vrot.slane %v1626, 1
      %v1633 = vsel %vm1467, %v1631, %v1632
      %v1634 = vrot.slane %v1627, 1
      %v1635 = vsel %vm1467, %v1632, %v1634
      %v1636 = vrot.slane %v1628, 1
      %v1637 = vsel %vm1467, %v1634, %v1636
      %v1638 = vrot.slane %v1629, 1
      %v1639 = vsel %vm1467, %v1636, %v1638
      %v1640 = vrot.slane %v1630, 1
      %v1641 = vsel %vm1467, %v1638, %v1640
      %v1663 = vunpack.c.l.b16 %v1587
      %v1664 = vunpack.c.l.b16 %v1588
      %v1665 = vunpack.c.l.b16 %v1589
      %v1666 = vunpack.c.l.b16 %v1590
      %v1667 = vunpack.c.l.b16 %v1591
      %v1668 = vunpack.c.l.b16 %v1592
      %v1669 = vunpack.c.l.b16 %v1593
      %v1670 = vunpack.c.l.b16 %v1594
      %v1671 = vunpack.c.l.b16 %v1595
      %v1672 = vunpack.c.l.b16 %v1596
      %v1673 = vunpack.c.l.b16 %v1597
      %v1674 = vunpack.c.l.b16 %v1598
      %v1675 = vunpack.c.l.b16 %v1599
      %v1676 = vunpack.c.l.b16 %v1600
      %v1677 = vunpack.c.l.b16 %v1601
      %v1678 = vunpack.c.l.b16 %v1602
      %v1679 = vpack.c.b16 %v1664, %v1663
      %v1680 = vpack.c.b16 %v1666, %v1665
      %v1681 = vpack.c.b16 %v1668, %v1667
      %v1682 = vpack.c.b16 %v1670, %v1669
      %v1683 = vpack.c.b16 %v1672, %v1671
      %v1684 = vpack.c.b16 %v1674, %v1673
      %v1685 = vpack.c.b16 %v1676, %v1675
      %v1686 = vpack.c.b16 %v1678, %v1677
      %1695 = vmatpush.bf16.msra.mxu0 %v1686
      %1696 = vmatpush.bf16.msra.mxu0 %v1685
      %1697 = vmatpush.bf16.msra.mxu0 %v1684
      %1698 = vmatpush.bf16.msra.mxu0 %v1683
      %1699 = vmatpush.bf16.msra.mxu0 %v1682
      %1700 = vmatpush.bf16.msra.mxu0 %v1681
      %1701 = vmatpush.bf16.msra.mxu0 %v1680
      %1702 = vmatpush.bf16.msra.mxu0 %v1679
      %1703 = vmatmul.bf16.gmra.mxu0 %v1633
      %v1704 = vpop.f32.mrf.mxu0
      %v1705 = vadd.f32 0.0, %v1704
      %v1706 = vpop.f32.mrf.mxu0
      %v1707 = vadd.f32 0.0, %v1706
      %1708 = vmatmul.bf16.gmra.mxu0 %v1635
      %v1709 = vpop.f32.mrf.mxu0
      %v1710 = vadd.f32 0.0, %v1709
      %v1711 = vpop.f32.mrf.mxu0
      %v1712 = vadd.f32 0.0, %v1711
      %1713 = vmatmul.bf16.gmra.mxu0 %v1637
      %v1714 = vpop.f32.mrf.mxu0
      %v1715 = vadd.f32 0.0, %v1714
      %v1716 = vpop.f32.mrf.mxu0
      %v1717 = vadd.f32 0.0, %v1716
      %1718 = vmatmul.bf16.gmra.mxu0 %v1639
      %v1719 = vpop.f32.mrf.mxu0
      %v1720 = vadd.f32 0.0, %v1719
      %v1721 = vpop.f32.mrf.mxu0
      %v1722 = vadd.f32 0.0, %v1721
      %1723 = vmatmul.bf16.gmra.mxu0 %v1641
      %v1724 = vpop.f32.mrf.mxu0
      %v1725 = vadd.f32 0.0, %v1724
      %v1726 = vpop.f32.mrf.mxu0
      %v1727 = vadd.f32 0.0, %v1726
      %1728 = vdwg.mxu0
      %v1729 = vadd.f32 %v1566, %v1705
      %v1730 = vadd.f32 %v1567, %v1707
      %v1731 = vadd.f32 %v1568, %v1710
      %v1732 = vadd.f32 %v1569, %v1712
      %v1733 = vadd.f32 %v1570, %v1715
      %v1734 = vadd.f32 %v1571, %v1717
      %v1735 = vadd.f32 %v1572, %v1720
      %v1736 = vadd.f32 %v1573, %v1722
      %v1737 = vadd.f32 %v1574, %v1725
      %v1738 = vadd.f32 %v1575, %v1727
      %v1739 = vld [vmem:[#allocation2 + $0x2c] sm:$0x3]
      %v1740 = vld [vmem:[%s3 + $0x100] sm:$0xf]
      %v1741 = vld [vmem:[%s3 + $0x104] sm:$0xf]
      %v1742 = vld [vmem:[%s3 + $0x108] sm:$0xf]
      %v1743 = vld [vmem:[%s3 + $0x10c] sm:$0xf]
      %v1744 = vld [vmem:[%s3 + $0x110] sm:$0xf]
      %v1745 = vld [vmem:[%s3 + $0x114] sm:$0xf]
      %v1746 = vld [vmem:[%s3 + $0x118] sm:$0xf]
      %v1747 = vld [vmem:[%s3 + $0x11c] sm:$0xf]
      %v1748 = vld [vmem:[%s3 + $0x120] sm:$0xf]
      %v1749 = vld [vmem:[%s3 + $0x124] sm:$0xf]
      %v1750 = vld [vmem:[%s3 + $0x128] sm:$0xf]
      %v1751 = vld [vmem:[%s3 + $0x12c] sm:$0xf]
      %v1752 = vld [vmem:[%s3 + $0x130] sm:$0xf]
      %v1753 = vld [vmem:[%s3 + $0x134] sm:$0xf]
      %v1754 = vld [vmem:[%s3 + $0x138] sm:$0xf]
      %v1755 = vld [vmem:[%s3 + $0x13c] sm:$0xf]
      %v1757 = vunpack.c.l.b16 %v1739
      %v1758 = vpack.c.b16 %v1757, %v1757
      %vm1759 = vsmask.f32 6400
      %v1761 = vshrl.u32 %v1625, 16
      %v1763 = vrot.slane %v1761, 1
      %v1764 = vshll.u32 %v1625, 16
      %v1766 = vrot.slane %v1764, 2
      %v1767 = vor.u32 %v1763, %v1766
      %v1769 = vshrl.u32 %v1626, 16
      %v1771 = vrot.slane %v1769, 1
      %v1772 = vshll.u32 %v1626, 16
      %v1774 = vrot.slane %v1772, 2
      %v1775 = vor.u32 %v1771, %v1774
      %v1776 = vsel %vm1759, %v1767, %v1775
      %v1778 = vshrl.u32 %v1627, 16
      %v1780 = vrot.slane %v1778, 1
      %v1781 = vshll.u32 %v1627, 16
      %v1783 = vrot.slane %v1781, 2
      %v1784 = vor.u32 %v1780, %v1783
      %v1785 = vsel %vm1759, %v1775, %v1784
      %v1787 = vshrl.u32 %v1628, 16
      %v1789 = vrot.slane %v1787, 1
      %v1790 = vshll.u32 %v1628, 16
      %v1792 = vrot.slane %v1790, 2
      %v1793 = vor.u32 %v1789, %v1792
      %v1794 = vsel %vm1759, %v1784, %v1793
      %v1796 = vshrl.u32 %v1629, 16
      %v1798 = vrot.slane %v1796, 1
      %v1799 = vshll.u32 %v1629, 16
      %v1801 = vrot.slane %v1799, 2
      %v1802 = vor.u32 %v1798, %v1801
      %v1803 = vsel %vm1759, %v1793, %v1802
      %v1805 = vshrl.u32 %v1758, 16
      %v1807 = vrot.slane %v1805, 1
      %v1808 = vshll.u32 %v1758, 16
      %v1810 = vrot.slane %v1808, 2
      %v1811 = vor.u32 %v1807, %v1810
      %v1812 = vsel %vm1759, %v1802, %v1811
      %v1834 = vunpack.c.l.b16 %v1740
      %v1835 = vunpack.c.l.b16 %v1741
      %v1836 = vunpack.c.l.b16 %v1742
      %v1837 = vunpack.c.l.b16 %v1743
      %v1838 = vunpack.c.l.b16 %v1744
      %v1839 = vunpack.c.l.b16 %v1745
      %v1840 = vunpack.c.l.b16 %v1746
      %v1841 = vunpack.c.l.b16 %v1747
      %v1842 = vunpack.c.l.b16 %v1748
      %v1843 = vunpack.c.l.b16 %v1749
      %v1844 = vunpack.c.l.b16 %v1750
      %v1845 = vunpack.c.l.b16 %v1751
      %v1846 = vunpack.c.l.b16 %v1752
      %v1847 = vunpack.c.l.b16 %v1753
      %v1848 = vunpack.c.l.b16 %v1754
      %v1849 = vunpack.c.l.b16 %v1755
      %v1850 = vpack.c.b16 %v1835, %v1834
      %v1851 = vpack.c.b16 %v1837, %v1836
      %v1852 = vpack.c.b16 %v1839, %v1838
      %v1853 = vpack.c.b16 %v1841, %v1840
      %v1854 = vpack.c.b16 %v1843, %v1842
      %v1855 = vpack.c.b16 %v1845, %v1844
      %v1856 = vpack.c.b16 %v1847, %v1846
      %v1857 = vpack.c.b16 %v1849, %v1848
      %1866 = vmatpush.bf16.msra.mxu0 %v1857
      %1867 = vmatpush.bf16.msra.mxu0 %v1856
      %1868 = vmatpush.bf16.msra.mxu0 %v1855
      %1869 = vmatpush.bf16.msra.mxu0 %v1854
      %1870 = vmatpush.bf16.msra.mxu0 %v1853
      %1871 = vmatpush.bf16.msra.mxu0 %v1852
      %1872 = vmatpush.bf16.msra.mxu0 %v1851
      %1873 = vmatpush.bf16.msra.mxu0 %v1850
      %1874 = vmatmul.bf16.gmra.mxu0 %v1776
      %v1875 = vpop.f32.mrf.mxu0
      %v1876 = vadd.f32 0.0, %v1875
      %v1877 = vpop.f32.mrf.mxu0
      %v1878 = vadd.f32 0.0, %v1877
      %1879 = vmatmul.bf16.gmra.mxu0 %v1785
      %v1880 = vpop.f32.mrf.mxu0
      %v1881 = vadd.f32 0.0, %v1880
      %v1882 = vpop.f32.mrf.mxu0
      %v1883 = vadd.f32 0.0, %v1882
      %1884 = vmatmul.bf16.gmra.mxu0 %v1794
      %v1885 = vpop.f32.mrf.mxu0
      %v1886 = vadd.f32 0.0, %v1885
      %v1887 = vpop.f32.mrf.mxu0
      %v1888 = vadd.f32 0.0, %v1887
      %1889 = vmatmul.bf16.gmra.mxu0 %v1803
      %v1890 = vpop.f32.mrf.mxu0
      %v1891 = vadd.f32 0.0, %v1890
      %v1892 = vpop.f32.mrf.mxu0
      %v1893 = vadd.f32 0.0, %v1892
      %1894 = vmatmul.bf16.gmra.mxu0 %v1812
      %v1895 = vpop.f32.mrf.mxu0
      %v1896 = vadd.f32 0.0, %v1895
      %v1897 = vpop.f32.mrf.mxu0
      %v1898 = vadd.f32 0.0, %v1897
      %1899 = vdwg.mxu0
      %v1900 = vadd.f32 %v1729, %v1876
      %v1901 = vadd.f32 %v1730, %v1878
      %v1902 = vadd.f32 %v1731, %v1881
      %v1903 = vadd.f32 %v1732, %v1883
      %v1904 = vadd.f32 %v1733, %v1886
      %v1905 = vadd.f32 %v1734, %v1888
      %v1906 = vadd.f32 %v1735, %v1891
      %v1907 = vadd.f32 %v1736, %v1893
      %v1908 = vadd.f32 %v1737, %v1896
      %v1909 = vadd.f32 %v1738, %v1898
      %v1910 = vld [vmem:[#allocation2 + $0x4] sm:$0xc]
      %v1911 = vld [vmem:[%s3 + $0x140] sm:$0xf]
      %v1912 = vld [vmem:[%s3 + $0x144] sm:$0xf]
      %v1913 = vld [vmem:[%s3 + $0x148] sm:$0xf]
      %v1914 = vld [vmem:[%s3 + $0x14c] sm:$0xf]
      %v1915 = vld [vmem:[%s3 + $0x150] sm:$0xf]
      %v1916 = vld [vmem:[%s3 + $0x154] sm:$0xf]
      %v1917 = vld [vmem:[%s3 + $0x158] sm:$0xf]
      %v1918 = vld [vmem:[%s3 + $0x15c] sm:$0xf]
      %v1919 = vld [vmem:[%s3 + $0x160] sm:$0xf]
      %v1920 = vld [vmem:[%s3 + $0x164] sm:$0xf]
      %v1921 = vld [vmem:[%s3 + $0x168] sm:$0xf]
      %v1922 = vld [vmem:[%s3 + $0x16c] sm:$0xf]
      %v1923 = vld [vmem:[%s3 + $0x170] sm:$0xf]
      %v1924 = vld [vmem:[%s3 + $0x174] sm:$0xf]
      %v1925 = vld [vmem:[%s3 + $0x178] sm:$0xf]
      %v1926 = vld [vmem:[%s3 + $0x17c] sm:$0xf]
      %v1928 = vunpack.c.l.b16 %v1910
      %v1929 = vpack.c.b16 %v1615, %v1928
      %vm1930 = vcmask 1045504
      %v1931 = vrot.slane %v1929, 2
      %v1932 = vrot.slane %v1626, 2
      %v1933 = vsel %vm1930, %v1931, %v1932
      %v1934 = vrot.slane %v1627, 2
      %v1935 = vsel %vm1930, %v1932, %v1934
      %v1936 = vrot.slane %v1628, 2
      %v1937 = vsel %vm1930, %v1934, %v1936
      %v1938 = vrot.slane %v1629, 2
      %v1939 = vsel %vm1930, %v1936, %v1938
      %v1940 = vrot.slane %v1758, 2
      %v1941 = vsel %vm1930, %v1938, %v1940
      %v1963 = vunpack.c.l.b16 %v1911
      %v1964 = vunpack.c.l.b16 %v1912
      %v1965 = vunpack.c.l.b16 %v1913
      %v1966 = vunpack.c.l.b16 %v1914
      %v1967 = vunpack.c.l.b16 %v1915
      %v1968 = vunpack.c.l.b16 %v1916
      %v1969 = vunpack.c.l.b16 %v1917
      %v1970 = vunpack.c.l.b16 %v1918
      %v1971 = vunpack.c.l.b16 %v1919
      %v1972 = vunpack.c.l.b16 %v1920
      %v1973 = vunpack.c.l.b16 %v1921
      %v1974 = vunpack.c.l.b16 %v1922
      %v1975 = vunpack.c.l.b16 %v1923
      %v1976 = vunpack.c.l.b16 %v1924
      %v1977 = vunpack.c.l.b16 %v1925
      %v1978 = vunpack.c.l.b16 %v1926
      %v1979 = vpack.c.b16 %v1964, %v1963
      %v1980 = vpack.c.b16 %v1966, %v1965
      %v1981 = vpack.c.b16 %v1968, %v1967
      %v1982 = vpack.c.b16 %v1970, %v1969
      %v1983 = vpack.c.b16 %v1972, %v1971
      %v1984 = vpack.c.b16 %v1974, %v1973
      %v1985 = vpack.c.b16 %v1976, %v1975
      %v1986 = vpack.c.b16 %v1978, %v1977
      %1995 = vmatpush.bf16.msra.mxu0 %v1986
      %1996 = vmatpush.bf16.msra.mxu0 %v1985
      %1997 = vmatpush.bf16.msra.mxu0 %v1984
      %1998 = vmatpush.bf16.msra.mxu0 %v1983
      %1999 = vmatpush.bf16.msra.mxu0 %v1982
      %2000 = vmatpush.bf16.msra.mxu0 %v1981
      %2001 = vmatpush.bf16.msra.mxu0 %v1980
      %2002 = vmatpush.bf16.msra.mxu0 %v1979
      %2003 = vmatmul.bf16.gmra.mxu0 %v1933
      %v2004 = vpop.f32.mrf.mxu0
      %v2005 = vadd.f32 0.0, %v2004
      %v2006 = vpop.f32.mrf.mxu0
      %v2007 = vadd.f32 0.0, %v2006
      %2008 = vmatmul.bf16.gmra.mxu0 %v1935
      %v2009 = vpop.f32.mrf.mxu0
      %v2010 = vadd.f32 0.0, %v2009
      %v2011 = vpop.f32.mrf.mxu0
      %v2012 = vadd.f32 0.0, %v2011
      %2013 = vmatmul.bf16.gmra.mxu0 %v1937
      %v2014 = vpop.f32.mrf.mxu0
      %v2015 = vadd.f32 0.0, %v2014
      %v2016 = vpop.f32.mrf.mxu0
      %v2017 = vadd.f32 0.0, %v2016
      %2018 = vmatmul.bf16.gmra.mxu0 %v1939
      %v2019 = vpop.f32.mrf.mxu0
      %v2020 = vadd.f32 0.0, %v2019
      %v2021 = vpop.f32.mrf.mxu0
      %v2022 = vadd.f32 0.0, %v2021
      %2023 = vmatmul.bf16.gmra.mxu0 %v1941
      %v2024 = vpop.f32.mrf.mxu0
      %v2025 = vadd.f32 0.0, %v2024
      %v2026 = vpop.f32.mrf.mxu0
      %v2027 = vadd.f32 0.0, %v2026
      %2028 = vdwg.mxu0
      %v2029 = vadd.f32 %v1900, %v2005
      %v2030 = vadd.f32 %v1901, %v2007
      %v2031 = vadd.f32 %v1902, %v2010
      %v2032 = vadd.f32 %v1903, %v2012
      %v2033 = vadd.f32 %v1904, %v2015
      %v2034 = vadd.f32 %v1905, %v2017
      %v2035 = vadd.f32 %v1906, %v2020
      %v2036 = vadd.f32 %v1907, %v2022
      %v2037 = vadd.f32 %v1908, %v2025
      %v2038 = vadd.f32 %v1909, %v2027
      %v2039 = vld [vmem:[#allocation2 + $0x8] sm:$0xc]
      %v2040 = vld [vmem:[#allocation2 + $0xc] sm:$0xf]
      %v2041 = vld [vmem:[#allocation2 + $0x10] sm:$0xf]
      %v2042 = vld [vmem:[#allocation2 + $0x14] sm:$0xf]
      %v2043 = vld [vmem:[#allocation2 + $0x18] sm:$0xf]
      %v2044 = vld [vmem:[#allocation2 + $0x1c] sm:$0xf]
      %v2045 = vld [vmem:[#allocation2 + $0x20] sm:$0xf]
      %v2046 = vld [vmem:[#allocation2 + $0x24] sm:$0xf]
      %v2047 = vld [vmem:[#allocation2 + $0x28] sm:$0xf]
      %v2048 = vld [vmem:[#allocation2 + $0x2c] sm:$0xf]
      %v2049 = vld [vmem:[#allocation2 + $0x30] sm:$0x3]
      %v2050 = vld [vmem:[%s3 + $0x180] sm:$0xf]
      %v2051 = vld [vmem:[%s3 + $0x184] sm:$0xf]
      %v2052 = vld [vmem:[%s3 + $0x188] sm:$0xf]
      %v2053 = vld [vmem:[%s3 + $0x18c] sm:$0xf]
      %v2054 = vld [vmem:[%s3 + $0x190] sm:$0xf]
      %v2055 = vld [vmem:[%s3 + $0x194] sm:$0xf]
      %v2056 = vld [vmem:[%s3 + $0x198] sm:$0xf]
      %v2057 = vld [vmem:[%s3 + $0x19c] sm:$0xf]
      %v2058 = vld [vmem:[%s3 + $0x1a0] sm:$0xf]
      %v2059 = vld [vmem:[%s3 + $0x1a4] sm:$0xf]
      %v2060 = vld [vmem:[%s3 + $0x1a8] sm:$0xf]
      %v2061 = vld [vmem:[%s3 + $0x1ac] sm:$0xf]
      %v2062 = vld [vmem:[%s3 + $0x1b0] sm:$0xf]
      %v2063 = vld [vmem:[%s3 + $0x1b4] sm:$0xf]
      %v2064 = vld [vmem:[%s3 + $0x1b8] sm:$0xf]
      %v2065 = vld [vmem:[%s3 + $0x1bc] sm:$0xf]
      %v2077 = vunpack.c.l.b16 %v2039
      %v2078 = vunpack.c.l.b16 %v2040
      %v2079 = vunpack.c.l.b16 %v2041
      %v2080 = vunpack.c.l.b16 %v2042
      %v2081 = vunpack.c.l.b16 %v2043
      %v2082 = vunpack.c.l.b16 %v2044
      %v2083 = vunpack.c.l.b16 %v2045
      %v2084 = vunpack.c.l.b16 %v2046
      %v2085 = vunpack.c.l.b16 %v2047
      %v2086 = vunpack.c.l.b16 %v2048
      %v2087 = vunpack.c.l.b16 %v2049
      %v2088 = vpack.c.b16 %v2078, %v2077
      %v2089 = vpack.c.b16 %v2080, %v2079
      %v2090 = vpack.c.b16 %v2082, %v2081
      %v2091 = vpack.c.b16 %v2084, %v2083
      %v2092 = vpack.c.b16 %v2086, %v2085
      %v2093 = vpack.c.b16 %v2087, %v2087
      %v2094 = vrot.slane %v2088, 2
      %v2095 = vrot.slane %v2089, 2
      %v2096 = vsel %vm1930, %v2094, %v2095
      %v2097 = vrot.slane %v2090, 2
      %v2098 = vsel %vm1930, %v2095, %v2097
      %v2099 = vrot.slane %v2091, 2
      %v2100 = vsel %vm1930, %v2097, %v2099
      %v2101 = vrot.slane %v2092, 2
      %v2102 = vsel %vm1930, %v2099, %v2101
      %v2103 = vrot.slane %v2093, 2
      %v2104 = vsel %vm1930, %v2101, %v2103
      %v2126 = vunpack.c.l.b16 %v2050
      %v2127 = vunpack.c.l.b16 %v2051
      %v2128 = vunpack.c.l.b16 %v2052
      %v2129 = vunpack.c.l.b16 %v2053
      %v2130 = vunpack.c.l.b16 %v2054
      %v2131 = vunpack.c.l.b16 %v2055
      %v2132 = vunpack.c.l.b16 %v2056
      %v2133 = vunpack.c.l.b16 %v2057
      %v2134 = vunpack.c.l.b16 %v2058
      %v2135 = vunpack.c.l.b16 %v2059
      %v2136 = vunpack.c.l.b16 %v2060
      %v2137 = vunpack.c.l.b16 %v2061
      %v2138 = vunpack.c.l.b16 %v2062
      %v2139 = vunpack.c.l.b16 %v2063
      %v2140 = vunpack.c.l.b16 %v2064
      %v2141 = vunpack.c.l.b16 %v2065
      %v2142 = vpack.c.b16 %v2127, %v2126
      %v2143 = vpack.c.b16 %v2129, %v2128
      %v2144 = vpack.c.b16 %v2131, %v2130
      %v2145 = vpack.c.b16 %v2133, %v2132
      %v2146 = vpack.c.b16 %v2135, %v2134
      %v2147 = vpack.c.b16 %v2137, %v2136
      %v2148 = vpack.c.b16 %v2139, %v2138
      %v2149 = vpack.c.b16 %v2141, %v2140
      %2158 = vmatpush.bf16.msra.mxu0 %v2149
      %2159 = vmatpush.bf16.msra.mxu0 %v2148
      %2160 = vmatpush.bf16.msra.mxu0 %v2147
      %2161 = vmatpush.bf16.msra.mxu0 %v2146
      %2162 = vmatpush.bf16.msra.mxu0 %v2145
      %2163 = vmatpush.bf16.msra.mxu0 %v2144
      %2164 = vmatpush.bf16.msra.mxu0 %v2143
      %2165 = vmatpush.bf16.msra.mxu0 %v2142
      %2166 = vmatmul.bf16.gmra.mxu0 %v2096
      %v2167 = vpop.f32.mrf.mxu0
      %v2168 = vadd.f32 0.0, %v2167
      %v2169 = vpop.f32.mrf.mxu0
      %v2170 = vadd.f32 0.0, %v2169
      %2171 = vmatmul.bf16.gmra.mxu0 %v2098
      %v2172 = vpop.f32.mrf.mxu0
      %v2173 = vadd.f32 0.0, %v2172
      %v2174 = vpop.f32.mrf.mxu0
      %v2175 = vadd.f32 0.0, %v2174
      %2176 = vmatmul.bf16.gmra.mxu0 %v2100
      %v2177 = vpop.f32.mrf.mxu0
      %v2178 = vadd.f32 0.0, %v2177
      %v2179 = vpop.f32.mrf.mxu0
      %v2180 = vadd.f32 0.0, %v2179
      %2181 = vmatmul.bf16.gmra.mxu0 %v2102
      %v2182 = vpop.f32.mrf.mxu0
      %v2183 = vadd.f32 0.0, %v2182
      %v2184 = vpop.f32.mrf.mxu0
      %v2185 = vadd.f32 0.0, %v2184
      %2186 = vmatmul.bf16.gmra.mxu0 %v2104
      %v2187 = vpop.f32.mrf.mxu0
      %v2188 = vadd.f32 0.0, %v2187
      %v2189 = vpop.f32.mrf.mxu0
      %v2190 = vadd.f32 0.0, %v2189
      %2191 = vdwg.mxu0
      %v2192 = vadd.f32 %v2029, %v2168
      %v2193 = vadd.f32 %v2030, %v2170
      %v2194 = vadd.f32 %v2031, %v2173
      %v2195 = vadd.f32 %v2032, %v2175
      %v2196 = vadd.f32 %v2033, %v2178
      %v2197 = vadd.f32 %v2034, %v2180
      %v2198 = vadd.f32 %v2035, %v2183
      %v2199 = vadd.f32 %v2036, %v2185
      %v2200 = vadd.f32 %v2037, %v2188
      %v2201 = vadd.f32 %v2038, %v2190
      %v2202 = vld [vmem:[#allocation2 + $0x30] sm:$0x7]
      %v2203 = vld [vmem:[%s3 + $0x1c0] sm:$0xf]
      %v2204 = vld [vmem:[%s3 + $0x1c4] sm:$0xf]
      %v2205 = vld [vmem:[%s3 + $0x1c8] sm:$0xf]
      %v2206 = vld [vmem:[%s3 + $0x1cc] sm:$0xf]
      %v2207 = vld [vmem:[%s3 + $0x1d0] sm:$0xf]
      %v2208 = vld [vmem:[%s3 + $0x1d4] sm:$0xf]
      %v2209 = vld [vmem:[%s3 + $0x1d8] sm:$0xf]
      %v2210 = vld [vmem:[%s3 + $0x1dc] sm:$0xf]
      %v2211 = vld [vmem:[%s3 + $0x1e0] sm:$0xf]
      %v2212 = vld [vmem:[%s3 + $0x1e4] sm:$0xf]
      %v2213 = vld [vmem:[%s3 + $0x1e8] sm:$0xf]
      %v2214 = vld [vmem:[%s3 + $0x1ec] sm:$0xf]
      %v2215 = vld [vmem:[%s3 + $0x1f0] sm:$0xf]
      %v2216 = vld [vmem:[%s3 + $0x1f4] sm:$0xf]
      %v2217 = vld [vmem:[%s3 + $0x1f8] sm:$0xf]
      %v2218 = vld [vmem:[%s3 + $0x1fc] sm:$0xf]
      %v2220 = vunpack.c.l.b16 %v2202
      %v2221 = vpack.c.b16 %v2220, %v2220
      %vm2222 = vsmask.f32 5376
      %v2224 = vshrl.u32 %v2088, 16
      %v2226 = vrot.slane %v2224, 2
      %v2227 = vshll.u32 %v2088, 16
      %v2229 = vrot.slane %v2227, 3
      %v2230 = vor.u32 %v2226, %v2229
      %v2232 = vshrl.u32 %v2089, 16
      %v2234 = vrot.slane %v2232, 2
      %v2235 = vshll.u32 %v2089, 16
      %v2237 = vrot.slane %v2235, 3
      %v2238 = vor.u32 %v2234, %v2237
      %v2239 = vsel %vm2222, %v2230, %v2238
      %v2241 = vshrl.u32 %v2090, 16
      %v2243 = vrot.slane %v2241, 2
      %v2244 = vshll.u32 %v2090, 16
      %v2246 = vrot.slane %v2244, 3
      %v2247 = vor.u32 %v2243, %v2246
      %v2248 = vsel %vm2222, %v2238, %v2247
      %v2250 = vshrl.u32 %v2091, 16
      %v2252 = vrot.slane %v2250, 2
      %v2253 = vshll.u32 %v2091, 16
      %v2255 = vrot.slane %v2253, 3
      %v2256 = vor.u32 %v2252, %v2255
      %v2257 = vsel %vm2222, %v2247, %v2256
      %v2259 = vshrl.u32 %v2092, 16
      %v2261 = vrot.slane %v2259, 2
      %v2262 = vshll.u32 %v2092, 16
      %v2264 = vrot.slane %v2262, 3
      %v2265 = vor.u32 %v2261, %v2264
      %v2266 = vsel %vm2222, %v2256, %v2265
      %v2268 = vshrl.u32 %v2221, 16
      %v2270 = vrot.slane %v2268, 2
      %v2271 = vshll.u32 %v2221, 16
      %v2273 = vrot.slane %v2271, 3
      %v2274 = vor.u32 %v2270, %v2273
      %v2275 = vsel %vm2222, %v2265, %v2274
      %v2297 = vunpack.c.l.b16 %v2203
      %v2298 = vunpack.c.l.b16 %v2204
      %v2299 = vunpack.c.l.b16 %v2205
      %v2300 = vunpack.c.l.b16 %v2206
      %v2301 = vunpack.c.l.b16 %v2207
      %v2302 = vunpack.c.l.b16 %v2208
      %v2303 = vunpack.c.l.b16 %v2209
      %v2304 = vunpack.c.l.b16 %v2210
      %v2305 = vunpack.c.l.b16 %v2211
      %v2306 = vunpack.c.l.b16 %v2212
      %v2307 = vunpack.c.l.b16 %v2213
      %v2308 = vunpack.c.l.b16 %v2214
      %v2309 = vunpack.c.l.b16 %v2215
      %v2310 = vunpack.c.l.b16 %v2216
      %v2311 = vunpack.c.l.b16 %v2217
      %v2312 = vunpack.c.l.b16 %v2218
      %v2313 = vpack.c.b16 %v2298, %v2297
      %v2314 = vpack.c.b16 %v2300, %v2299
      %v2315 = vpack.c.b16 %v2302, %v2301
      %v2316 = vpack.c.b16 %v2304, %v2303
      %v2317 = vpack.c.b16 %v2306, %v2305
      %v2318 = vpack.c.b16 %v2308, %v2307
      %v2319 = vpack.c.b16 %v2310, %v2309
      %v2320 = vpack.c.b16 %v2312, %v2311
      %2329 = vmatpush.bf16.msra.mxu0 %v2320
      %2330 = vmatpush.bf16.msra.mxu0 %v2319
      %2331 = vmatpush.bf16.msra.mxu0 %v2318
      %2332 = vmatpush.bf16.msra.mxu0 %v2317
      %2333 = vmatpush.bf16.msra.mxu0 %v2316
      %2334 = vmatpush.bf16.msra.mxu0 %v2315
      %2335 = vmatpush.bf16.msra.mxu0 %v2314
      %2336 = vmatpush.bf16.msra.mxu0 %v2313
      %2337 = vmatmul.bf16.gmra.mxu0 %v2239
      %v2338 = vpop.f32.mrf.mxu0
      %v2339 = vadd.f32 0.0, %v2338
      %v2340 = vpop.f32.mrf.mxu0
      %v2341 = vadd.f32 0.0, %v2340
      %2342 = vmatmul.bf16.gmra.mxu0 %v2248
      %v2343 = vpop.f32.mrf.mxu0
      %v2344 = vadd.f32 0.0, %v2343
      %v2345 = vpop.f32.mrf.mxu0
      %v2346 = vadd.f32 0.0, %v2345
      %2347 = vmatmul.bf16.gmra.mxu0 %v2257
      %v2348 = vpop.f32.mrf.mxu0
      %v2349 = vadd.f32 0.0, %v2348
      %v2350 = vpop.f32.mrf.mxu0
      %v2351 = vadd.f32 0.0, %v2350
      %2352 = vmatmul.bf16.gmra.mxu0 %v2266
      %v2353 = vpop.f32.mrf.mxu0
      %v2354 = vadd.f32 0.0, %v2353
      %v2355 = vpop.f32.mrf.mxu0
      %v2356 = vadd.f32 0.0, %v2355
      %2357 = vmatmul.bf16.gmra.mxu0 %v2275
      %v2358 = vpop.f32.mrf.mxu0
      %v2359 = vadd.f32 0.0, %v2358
      %v2360 = vpop.f32.mrf.mxu0
      %v2361 = vadd.f32 0.0, %v2360
      %2362 = vdwg.mxu0
      %v2363 = vadd.f32 %v2192, %v2339
      %v2364 = vadd.f32 %v2193, %v2341
      %v2365 = vadd.f32 %v2194, %v2344
      %v2366 = vadd.f32 %v2195, %v2346
      %v2367 = vadd.f32 %v2196, %v2349
      %v2368 = vadd.f32 %v2197, %v2351
      %v2369 = vadd.f32 %v2198, %v2354
      %v2370 = vadd.f32 %v2199, %v2356
      %v2371 = vadd.f32 %v2200, %v2359
      %v2372 = vadd.f32 %v2201, %v2361
      %v2373 = vld [vmem:[#allocation2 + $0x8] sm:$0x8]
      %v2374 = vld [vmem:[%s3 + $0x200] sm:$0xf]
      %v2375 = vld [vmem:[%s3 + $0x204] sm:$0xf]
      %v2376 = vld [vmem:[%s3 + $0x208] sm:$0xf]
      %v2377 = vld [vmem:[%s3 + $0x20c] sm:$0xf]
      %v2378 = vld [vmem:[%s3 + $0x210] sm:$0xf]
      %v2379 = vld [vmem:[%s3 + $0x214] sm:$0xf]
      %v2380 = vld [vmem:[%s3 + $0x218] sm:$0xf]
      %v2381 = vld [vmem:[%s3 + $0x21c] sm:$0xf]
      %v2382 = vld [vmem:[%s3 + $0x220] sm:$0xf]
      %v2383 = vld [vmem:[%s3 + $0x224] sm:$0xf]
      %v2384 = vld [vmem:[%s3 + $0x228] sm:$0xf]
      %v2385 = vld [vmem:[%s3 + $0x22c] sm:$0xf]
      %v2386 = vld [vmem:[%s3 + $0x230] sm:$0xf]
      %v2387 = vld [vmem:[%s3 + $0x234] sm:$0xf]
      %v2388 = vld [vmem:[%s3 + $0x238] sm:$0xf]
      %v2389 = vld [vmem:[%s3 + $0x23c] sm:$0xf]
      %v2391 = vunpack.c.l.b16 %v2373
      %v2392 = vpack.c.b16 %v2078, %v2391
      %vm2393 = vcmask 1044480
      %v2394 = vrot.slane %v2392, 3
      %v2395 = vrot.slane %v2089, 3
      %v2396 = vsel %vm2393, %v2394, %v2395
      %v2397 = vrot.slane %v2090, 3
      %v2398 = vsel %vm2393, %v2395, %v2397
      %v2399 = vrot.slane %v2091, 3
      %v2400 = vsel %vm2393, %v2397, %v2399
      %v2401 = vrot.slane %v2092, 3
      %v2402 = vsel %vm2393, %v2399, %v2401
      %v2403 = vrot.slane %v2221, 3
      %v2404 = vsel %vm2393, %v2401, %v2403
      %v2426 = vunpack.c.l.b16 %v2374
      %v2427 = vunpack.c.l.b16 %v2375
      %v2428 = vunpack.c.l.b16 %v2376
      %v2429 = vunpack.c.l.b16 %v2377
      %v2430 = vunpack.c.l.b16 %v2378
      %v2431 = vunpack.c.l.b16 %v2379
      %v2432 = vunpack.c.l.b16 %v2380
      %v2433 = vunpack.c.l.b16 %v2381
      %v2434 = vunpack.c.l.b16 %v2382
      %v2435 = vunpack.c.l.b16 %v2383
      %v2436 = vunpack.c.l.b16 %v2384
      %v2437 = vunpack.c.l.b16 %v2385
      %v2438 = vunpack.c.l.b16 %v2386
      %v2439 = vunpack.c.l.b16 %v2387
      %v2440 = vunpack.c.l.b16 %v2388
      %v2441 = vunpack.c.l.b16 %v2389
      %v2442 = vpack.c.b16 %v2427, %v2426
      %v2443 = vpack.c.b16 %v2429, %v2428
      %v2444 = vpack.c.b16 %v2431, %v2430
      %v2445 = vpack.c.b16 %v2433, %v2432
      %v2446 = vpack.c.b16 %v2435, %v2434
      %v2447 = vpack.c.b16 %v2437, %v2436
      %v2448 = vpack.c.b16 %v2439, %v2438
      %v2449 = vpack.c.b16 %v2441, %v2440
      %2458 = vmatpush.bf16.msra.mxu0 %v2449
      %2459 = vmatpush.bf16.msra.mxu0 %v2448
      %2460 = vmatpush.bf16.msra.mxu0 %v2447
      %2461 = vmatpush.bf16.msra.mxu0 %v2446
      %2462 = vmatpush.bf16.msra.mxu0 %v2445
      %2463 = vmatpush.bf16.msra.mxu0 %v2444
      %2464 = vmatpush.bf16.msra.mxu0 %v2443
      %2465 = vmatpush.bf16.msra.mxu0 %v2442
      %2466 = vmatmul.bf16.gmra.mxu0 %v2396
      %v2467 = vpop.f32.mrf.mxu0
      %v2468 = vadd.f32 0.0, %v2467
      %v2469 = vpop.f32.mrf.mxu0
      %v2470 = vadd.f32 0.0, %v2469
      %2471 = vmatmul.bf16.gmra.mxu0 %v2398
      %v2472 = vpop.f32.mrf.mxu0
      %v2473 = vadd.f32 0.0, %v2472
      %v2474 = vpop.f32.mrf.mxu0
      %v2475 = vadd.f32 0.0, %v2474
      %2476 = vmatmul.bf16.gmra.mxu0 %v2400
      %v2477 = vpop.f32.mrf.mxu0
      %v2478 = vadd.f32 0.0, %v2477
      %v2479 = vpop.f32.mrf.mxu0
      %v2480 = vadd.f32 0.0, %v2479
      %2481 = vmatmul.bf16.gmra.mxu0 %v2402
      %v2482 = vpop.f32.mrf.mxu0
      %v2483 = vadd.f32 0.0, %v2482
      %v2484 = vpop.f32.mrf.mxu0
      %v2485 = vadd.f32 0.0, %v2484
      %2486 = vmatmul.bf16.gmra.mxu0 %v2404
      %v2487 = vpop.f32.mrf.mxu0
      %v2488 = vadd.f32 0.0, %v2487
      %v2489 = vpop.f32.mrf.mxu0
      %v2490 = vadd.f32 0.0, %v2489
      %2491 = vdwg.mxu0
      %v2492 = vadd.f32 %v2363, %v2468
      %v2493 = vadd.f32 %v2364, %v2470
      %v2494 = vadd.f32 %v2365, %v2473
      %v2495 = vadd.f32 %v2366, %v2475
      %v2496 = vadd.f32 %v2367, %v2478
      %v2497 = vadd.f32 %v2368, %v2480
      %v2498 = vadd.f32 %v2369, %v2483
      %v2499 = vadd.f32 %v2370, %v2485
      %v2500 = vadd.f32 %v2371, %v2488
      %v2501 = vadd.f32 %v2372, %v2490
      %v2502 = vld [vmem:[%s4] sm:$0x1]
      %v2504 = vperm.slane %v2502, 0
      %v2506 = vadd.f32 %v2492, %v2504
      %v2507 = vadd.f32 %v2493, %v2504
      %v2508 = vadd.f32 %v2494, %v2504
      %v2509 = vadd.f32 %v2495, %v2504
      %v2510 = vadd.f32 %v2496, %v2504
      %v2511 = vadd.f32 %v2497, %v2504
      %v2512 = vadd.f32 %v2498, %v2504
      %v2513 = vadd.f32 %v2499, %v2504
      %v2514 = vadd.f32 %v2500, %v2504
      %v2515 = vadd.f32 %v2501, %v2504
      %v2516 = vld [vmem:[%s6] sm:$0x1]
      %v2518 = vperm.slane %v2516, 0
      %v2520 = vadd.f32 %v2506, %v2518
      %v2521 = vadd.f32 %v2507, %v2518
      %v2522 = vadd.f32 %v2508, %v2518
      %v2523 = vadd.f32 %v2509, %v2518
      %v2524 = vadd.f32 %v2510, %v2518
      %v2525 = vadd.f32 %v2511, %v2518
      %v2526 = vadd.f32 %v2512, %v2518
      %v2527 = vadd.f32 %v2513, %v2518
      %v2528 = vadd.f32 %v2514, %v2518
      %v2529 = vadd.f32 %v2515, %v2518
      %v2530 = vmax.f32 %v2520, 0.0
      %v2531 = vmax.f32 %v2521, 0.0
      %v2532 = vmax.f32 %v2522, 0.0
      %v2533 = vmax.f32 %v2523, 0.0
      %v2534 = vmax.f32 %v2524, 0.0
      %v2535 = vmax.f32 %v2525, 0.0
      %v2536 = vmax.f32 %v2526, 0.0
      %v2537 = vmax.f32 %v2527, 0.0
      %v2538 = vmax.f32 %v2528, 0.0
      %v2539 = vmax.f32 %v2529, 0.0
      %2540 = vst [vmem:[%s278] sm:$0xff] %v2530
      %2541 = vst [vmem:[%s278 + $0x8] sm:$0xff] %v2531
      %2542 = vst [vmem:[%s278 + $0x10] sm:$0xff] %v2532
      %2543 = vst [vmem:[%s278 + $0x18] sm:$0xff] %v2533
      %2544 = vst [vmem:[%s278 + $0x20] sm:$0xff] %v2534
      %2545 = vst [vmem:[%s278 + $0x28] sm:$0xff] %v2535
      %2546 = vst [vmem:[%s278 + $0x30] sm:$0xff] %v2536
      %2547 = vst [vmem:[%s278 + $0x38] sm:$0xff] %v2537
      %2548 = vst [vmem:[%s278 + $0x40] sm:$0xff] %v2538
      %2549 = vst [vmem:[%s278 + $0x48] sm:$0xff] %v2539
      %p2550 = scmp.lt.s32.totalorder %s18, 1
      %s2551 = scalar_select %p2550, %s18, 1
      %s2552 = smul.addr %s2551, 10
      %s2553 = smul.addr %s2552, 8
      %s2554 = scalar_lea.vmem %s7, %s2553
      // Predicated region
      $region49: #{residual_block_forward.1} parent=47 // pred_check
        %p2555 = pneg %p188
      $region50: #{residual_block_forward.1} parent=47 // pred_check_branch
        %2557 = sbr.rel (%p2555) target = $region52
      $region51: #{residual_block_forward.1} parent=47 // pred_region
        _
      $region52: #{residual_block_forward.1} parent=47 // pred_fallthru
        _
    $region48: #{residual_block_forward.1} parent=5 // pred_fallthru
      _
    %p2558 = scmp.le.s32.totalorder 2, %s13
    // Predicated region
    $region53: #{residual_block_forward.1} parent=5 // pred_check
      %p2559 = pneg %p2558
    $region54: #{residual_block_forward.1} parent=5 // pred_check_branch
      %2561 = sbr.rel (%p2559) target = $region56
    $region55: #{residual_block_forward.1} parent=5 // pred_region
      %s2562 = ssub.s32 %s13, 2
      // Predicated region
      $region57: #{residual_block_forward.1} parent=55 // pred_check
        %p2563 = pneg %p194
      $region58: #{residual_block_forward.1} parent=55 // pred_check_branch
        %2565 = sbr.rel (%p2563) target = $region60
      $region59: #{residual_block_forward.1} parent=55 // pred_region
        %p2566 = scmp.lt.s32.totalorder %s19, 1
        %s2567 = scalar_select %p2566, %s19, 1
        %s2568 = smul.addr %s2567, 10
        %s2569 = smul.addr %s2568, 8
        %s2570 = scalar_lea.vmem %s7, %s2569
      $region60: #{residual_block_forward.1} parent=55 // pred_fallthru
        _
    $region56: #{residual_block_forward.1} parent=5 // pred_fallthru
      _
  $region6: #{residual_block_forward.1} parent=0 // loop_footer
    %s17 = sadd.s32 1, %s13
  $region7: #{residual_block_forward.1} parent=0 // loop_footer_branch
    %12 = sbr.rel target = $region3
  $region8: #{residual_block_forward.1} parent=0 // loop_exit
    _

</llo_original>
